<compile_context>
chip_gen: v7x
topology: tpu7x:2x2x1
jax: 0.10.0
libtpu: 0.0.40
codegen_flags: <defaults>
</compile_context>

<pallas_src>
import functools

import jax
import jax.numpy as jnp
import numpy as np
from jax import lax
from jax.experimental import pallas as pl
from jax.experimental.pallas import tpu as pltpu
from jax.scipy.special import erf as _erf_exact

_EPS = 1e-5
_INV_SQRT2 = 0.7071067811865476
# Abramowitz & Stegun 7.1.26 rational erf approximation (|err| <= 1.5e-7).
_A1, _A2, _A3, _A4, _A5 = 0.254829592, -0.284496736, 1.421413741, -1.453152027, 1.061405429
_P = 0.3275911


# ---------------- in-kernel math helpers -----------------------------------------
def _gelu(x):
    """Exact (erf-based) GELU, matching torch.nn.GELU() default."""
    z = x * _INV_SQRT2
    az = jnp.abs(z)
    d = 1.0 + _P * az
    # EUP-seeded reciprocal + one Newton step: removes the multi-op VALU divide
    # (VALU is the first slot to saturate here) while keeping f32-level accuracy.
    r = pl.reciprocal(d, approx=True)
    t = r * (2.0 - d * r)
    poly = ((((_A5 * t + _A4) * t + _A3) * t + _A2) * t + _A1) * t
    e = 1.0 - poly * jnp.exp(-az * az)          # exp -> EUP
    erf_z = jnp.where(z >= 0.0, e, -e)          # single select instead of sign*(...)
    return 0.5 * x * (1.0 + erf_z)


def _conv1d_k3(x, w3, b, left_ok, right_ok, n_lanes):
    """Conv1d(k=3, padding=1) on the (C, B*L) layout as ONE matmul.

    x  : (H, N)  activations, N = B*L on the lane axis
    w3 : (H, 3H) the three taps concatenated along the input-channel axis
         (tap k=0 -> x[l-1], k=1 -> x[l], k=2 -> x[l+1])
    b  : (H, 1)
    """
    # Shifted taps via XLU lane rotation + boundary masks (zero padding per sequence,
    # no leakage across the batch segments folded into the lane dimension).
    xm1 = jnp.where(left_ok, pltpu.roll(x, shift=1, axis=1), 0.0)              # x[l-1]
    xp1 = jnp.where(right_ok, pltpu.roll(x, shift=n_lanes - 1, axis=1), 0.0)   # x[l+1]
    x3 = jnp.concatenate([xm1, x, xp1], axis=0)                                # (3H, N)
    return jnp.dot(w3, x3, preferred_element_type=jnp.float32) + b


def _batchnorm(x, gamma, beta, inv_n):
    """Training-mode BatchNorm1d: stats over (batch, seq) == all lanes, biased var.

    Single pass: var = E[x^2] - mu^2 (one extra fused x*x, one fewer reduction pass).
    """
    s = jnp.sum(x, axis=1, keepdims=True)
    s2 = jnp.sum(x * x, axis=1, keepdims=True)
    mu = s * inv_n
    var = s2 * inv_n - mu * mu
    return gamma * ((x - mu) * lax.rsqrt(var + _EPS)) + beta


# ---------------- Pallas kernel ---------------------------------------------------
def resnet_extractor_kernel(x_ref, w_in_ref, b_in_ref, w3_ref, conv_b_ref,
                            gamma_ref, beta_ref, w_out_ref, b_out_ref, out_ref,
                            *, num_layers, batch, seq_len):
    n = batch * seq_len
    inv_n = 1.0 / float(n)

    # Per-lane "position within its own sequence" -> boundary masks, built once and
    # shared by every k=3 conv in the network.
    lane = lax.broadcasted_iota(jnp.int32, (1, n), 1)
    pos = lane % seq_len
    left_ok = pos > 0                   # tap x[l-1] valid
    right_ok = pos < (seq_len - 1)      # tap x[l+1] valid

    x = x_ref[...]                      # (Cin, B*L)

    # input projection (k=1 conv) + GELU : one (H,Cin)x(Cin,B*L) matmul
    h = _gelu(jnp.dot(w_in_ref[...], x, preferred_element_type=jnp.float32)
              + b_in_ref[...])

    # residual blocks (statically unrolled; all weights VMEM-resident at these sizes)
    # TODO(synk): for production hidden_dim/num_layers, switch to grid=(num_layers,)
    # with per-layer weight BlockSpecs (streamed, explicit vmem_limit_bytes for v7x's
    # 64 MiB VMEM), bf16 MXU inputs on v6e/v7x, and a 'parallel' B*L-chunk axis so
    # v7x's second TensorCore is used. Pure overhead at these toy shapes.
    for l in range(num_layers):
        identity = h
        y = _conv1d_k3(h, w3_ref[l, 0], conv_b_ref[l, 0], left_ok, right_ok, n)
        y = _batchnorm(y, gamma_ref[l, 0], beta_ref[l, 0], inv_n)
        y = _gelu(y)
        y = _conv1d_k3(y, w3_ref[l, 1], conv_b_ref[l, 1], left_ok, right_ok, n)
        y = _batchnorm(y, gamma_ref[l, 1], beta_ref[l, 1], inv_n)
        h = _gelu(y + identity)

    # output projection (k=1 conv) -> lane-dense (Cout, B*L) store
    out_ref[...] = (jnp.dot(w_out_ref[...], h, preferred_element_type=jnp.float32)
                    + b_out_ref[...])


def resnet_extractor(x, params, *, num_layers):
    B, Cin, L = x.shape
    Cout = params["w_out"].shape[0]

    # Layout plumbing in XLA, outside the kernel: fold batch into the lane dim.
    x2d = jnp.transpose(x, (1, 0, 2)).reshape(Cin, B * L)

    # Fuse the 3 conv taps into one (H, 3H) weight per conv (tap k=0|1|2 along Cin).
    w3 = jnp.concatenate([params["conv_w"][:, :, k] for k in range(3)], axis=-1)

    kernel = functools.partial(resnet_extractor_kernel,
                               num_layers=num_layers, batch=B, seq_len=L)
    vmem = pl.BlockSpec(memory_space=pltpu.MemorySpace.VMEM)
    out2d = pl.pallas_call(
        kernel,
        out_shape=jax.ShapeDtypeStruct((Cout, B * L), jnp.float32),
        in_specs=[vmem] * 9,
        out_specs=vmem,
    )(x2d, params["w_in"], params["b_in"], w3, params["conv_b"],
      params["gamma"], params["beta"], params["w_out"], params["b_out"])

    # Undo the layout fold (cheap XLA reshape/transpose).
    return jnp.transpose(out2d.reshape(Cout, B, L), (1, 0, 2))


# ---------------- plain-JAX reference (independent layout, exact erf) -------------
def _ref_gelu(v):
    return 0.5 * v * (1.0 + _erf_exact(v * _INV_SQRT2))


def _ref_shift(v, s):
    # y[..., l] = v[..., l + s], zero padded outside [0, L); s in {-1, 0, 1}
    B, C, L = v.shape
    if s == 0:
        return v
    z = jnp.zeros((B, C, abs(s)), v.dtype)
    if s > 0:
        return jnp.concatenate([v[:, :, s:], z], axis=-1)
    return jnp.concatenate([z, v[:, :, :L + s]], axis=-1)


def reference_forward(x, params, *, num_layers):
    def pconv(v, w, b):
        return jnp.einsum("oi,bil->bol", w, v) + b[None]

    def conv3(v, w, b):          # w: (3, Cout, Cin); tap k reads v[..., l + k - 1]
        return sum(jnp.einsum("oi,bil->bol", w[k], _ref_shift(v, k - 1))
                   for k in range(3)) + b[None]

    def bn(v, gamma, beta):      # training-mode stats over (batch, seq), biased var
        mu = jnp.mean(v, axis=(0, 2), keepdims=True)
        var = jnp.mean(jnp.square(v - mu), axis=(0, 2), keepdims=True)
        return gamma[None] * ((v - mu) * lax.rsqrt(var + _EPS)) + beta[None]

    h = _ref_gelu(pconv(x, params["w_in"], params["b_in"]))
    for l in range(num_layers):
        identity = h
        y = conv3(h, params["conv_w"][l, 0], params["conv_b"][l, 0])
        y = bn(y, params["gamma"][l, 0], params["beta"][l, 0])
        y = _ref_gelu(y)
        y = conv3(y, params["conv_w"][l, 1], params["conv_b"][l, 1])
        y = bn(y, params["gamma"][l, 1], params["beta"][l, 1])
        h = _ref_gelu(y + identity)
    return pconv(h, params["w_out"], params["b_out"])


# ---------------- deterministic parameter construction ---------------------------
def init_params(key, in_channels, hidden_dim, out_channels, num_layers):
    ks = jax.random.split(key, 6)
    return dict(
        # Conv1d(in_channels, hidden_dim, k=1): weight (H, Cin, 1) -> squeezed (H, Cin)
        w_in=0.3 * jax.random.normal(ks[0], (hidden_dim, in_channels), jnp.float32),
        b_in=0.1 * jax.random.normal(ks[1], (hidden_dim, 1), jnp.float32),
        # per block: two Conv1d(H, H, k=3) weights, stored tap-major (L, 2, 3, H, H)
        conv_w=0.2 * jax.random.normal(
            ks[2], (num_layers, 2, 3, hidden_dim, hidden_dim), jnp.float32),
        conv_b=0.1 * jax.random.normal(
            ks[3], (num_layers, 2, hidden_dim, 1), jnp.float32),
        # BatchNorm1d affine params (PyTorch init: weight=1, bias=0)
        gamma=jnp.ones((num_layers, 2, hidden_dim, 1), jnp.float32),
        beta=jnp.zeros((num_layers, 2, hidden_dim, 1), jnp.float32),
        # Conv1d(hidden_dim, out_channels, k=1)
        w_out=0.3 * jax.random.normal(ks[4], (out_channels, hidden_dim), jnp.float32),
        b_out=0.1 * jax.random.normal(ks[5], (out_channels, 1), jnp.float32),
    )


if __name__ == "__main__":
    # SEQ chosen so B*L = 128: the kernel's lane dimension is exactly one vreg width
    # -> unmasked (lane-dense) stores and aligned lane rotates. Total data is still tiny.
    B, C_IN, HIDDEN, C_OUT, SEQ, NUM_LAYERS = 2, 4, 32, 16, 64, 2

    key = jax.random.PRNGKey(0)
    kx, kp = jax.random.split(key)
    x = jax.random.normal(kx, (B, C_IN, SEQ), jnp.float32)
    params = init_params(kp, C_IN, HIDDEN, C_OUT, NUM_LAYERS)

    out = jax.block_until_ready(resnet_extractor(x, params, num_layers=NUM_LAYERS))
    assert out.shape == (B, C_OUT, SEQ), out.shape

    ref = jax.block_until_ready(reference_forward(x, params, num_layers=NUM_LAYERS))
    # Kernel-vs-reference deltas: A&S erf (<=1.5e-7), Newton-refined EUP reciprocal,
    # one-pass BN variance, matmul reassociation -> all well inside 2e-4.
    np.testing.assert_allclose(np.asarray(out), np.asarray(ref), rtol=2e-4, atol=2e-4)

    print("KERNEL_OK")
</pallas_src>

<mosaic_0001>
module attributes {stable_mosaic.version = 11 : i64} {
  func.func @resnet_extractor_kernel(%arg0: memref<4x128xf32, #tpu.memory_space<vmem>>, %arg1: memref<32x4xf32, #tpu.memory_space<vmem>>, %arg2: memref<32x1xf32, #tpu.memory_space<vmem>>, %arg3: memref<2x2x32x96xf32, #tpu.memory_space<vmem>>, %arg4: memref<2x2x32x1xf32, #tpu.memory_space<vmem>>, %arg5: memref<2x2x32x1xf32, #tpu.memory_space<vmem>>, %arg6: memref<2x2x32x1xf32, #tpu.memory_space<vmem>>, %arg7: memref<16x32xf32, #tpu.memory_space<vmem>>, %arg8: memref<16x1xf32, #tpu.memory_space<vmem>>, %arg9: memref<16x128xf32, #tpu.memory_space<vmem>>) attributes {dimension_semantics = [], scalar_prefetch = 0 : i64, scratch_operands = 0 : i64, tpu.core_type = #tpu.core_type<tc>} {
    %0 = tpu.iota {dimensions = array<i32: 1>} : vector<1x128xi32>
    %c64_i32 = arith.constant 64 : i32
    %c0_i32 = arith.constant 0 : i32
    %1 = arith.cmpi eq, %c64_i32, %c0_i32 : i32
    %c1_i32 = arith.constant 1 : i32
    %2 = arith.select %1, %c1_i32, %c64_i32 : i32
    %3 = vector.broadcast %2 : i32 to vector<1x128xi32>
    %4 = arith.remsi %0, %3 : vector<1x128xi32>
    %c0_i32_0 = arith.constant 0 : i32
    %5 = vector.broadcast %c0_i32_0 : i32 to vector<1x128xi32>
    %6 = arith.cmpi ne, %4, %5 : vector<1x128xi32>
    %c0_i32_1 = arith.constant 0 : i32
    %7 = vector.broadcast %c0_i32_1 : i32 to vector<1x128xi32>
    %8 = arith.cmpi slt, %4, %7 : vector<1x128xi32>
    %c0_i32_2 = arith.constant 0 : i32
    %9 = arith.cmpi slt, %2, %c0_i32_2 : i32
    %10 = vector.broadcast %9 : i1 to vector<1x128xi1>
    %11 = vector.broadcast %10 : vector<1x128xi1> to vector<1x128xi1>
    %12 = arith.xori %8, %11 : vector<1x128xi1>
    %13 = arith.andi %12, %6 : vector<1x128xi1>
    %14 = vector.broadcast %2 : i32 to vector<1x128xi32>
    %15 = arith.addi %4, %14 : vector<1x128xi32>
    %16 = arith.select %13, %15, %4 : vector<1x128xi1>, vector<1x128xi32>
    %c0_i32_3 = arith.constant 0 : i32
    %17 = vector.broadcast %c0_i32_3 : i32 to vector<1x128xi32>
    %18 = arith.cmpi sgt, %16, %17 : vector<1x128xi32>
    %c63_i32 = arith.constant 63 : i32
    %19 = vector.broadcast %c63_i32 : i32 to vector<1x128xi32>
    %20 = arith.cmpi slt, %16, %19 : vector<1x128xi32>
    %c0 = arith.constant 0 : index
    %c0_4 = arith.constant 0 : index
    %21 = vector.load %arg0[%c0, %c0_4] : memref<4x128xf32, #tpu.memory_space<vmem>>, vector<4x128xf32>
    %c0_5 = arith.constant 0 : index
    %c0_6 = arith.constant 0 : index
    %22 = vector.load %arg1[%c0_5, %c0_6] : memref<32x4xf32, #tpu.memory_space<vmem>>, vector<32x4xf32>
    %cst = arith.constant dense<0.000000e+00> : vector<32x128xf32>
    %23 = tpu.matmul %22, %21, %cst {dimension_numbers = #tpu.dot_dimension_numbers<[1], [0], [0], [1], [0, 0, 1, 1], [], []>} : vector<32x4xf32>, vector<4x128xf32>, vector<32x128xf32> -> vector<32x128xf32>
    %c0_7 = arith.constant 0 : index
    %c0_8 = arith.constant 0 : index
    %24 = vector.load %arg2[%c0_7, %c0_8] : memref<32x1xf32, #tpu.memory_space<vmem>>, vector<32x1xf32>
    %25 = vector.broadcast %24 : vector<32x1xf32> to vector<32x128xf32>
    %26 = arith.addf %23, %25 : vector<32x128xf32>
    %cst_9 = arith.constant 0.707106769 : f32
    %27 = vector.broadcast %cst_9 : f32 to vector<32x128xf32>
    %28 = arith.mulf %26, %27 : vector<32x128xf32>
    %29 = math.absf %28 : vector<32x128xf32>
    %cst_10 = arith.constant 0.327591091 : f32
    %30 = vector.broadcast %cst_10 : f32 to vector<32x128xf32>
    %31 = arith.mulf %30, %29 : vector<32x128xf32>
    %cst_11 = arith.constant 1.000000e+00 : f32
    %32 = vector.broadcast %cst_11 : f32 to vector<32x128xf32>
    %33 = arith.addf %32, %31 : vector<32x128xf32>
    %34 = tpu.reciprocal %33 {approx = true} : vector<32x128xf32> -> vector<32x128xf32>
    %35 = arith.mulf %33, %34 : vector<32x128xf32>
    %cst_12 = arith.constant 2.000000e+00 : f32
    %36 = vector.broadcast %cst_12 : f32 to vector<32x128xf32>
    %37 = arith.subf %36, %35 : vector<32x128xf32>
    %38 = arith.mulf %34, %37 : vector<32x128xf32>
    %cst_13 = arith.constant 1.06140542 : f32
    %39 = vector.broadcast %cst_13 : f32 to vector<32x128xf32>
    %40 = arith.mulf %39, %38 : vector<32x128xf32>
    %cst_14 = arith.constant -1.45315206 : f32
    %41 = vector.broadcast %cst_14 : f32 to vector<32x128xf32>
    %42 = arith.addf %40, %41 : vector<32x128xf32>
    %43 = arith.mulf %42, %38 : vector<32x128xf32>
    %cst_15 = arith.constant 1.42141378 : f32
    %44 = vector.broadcast %cst_15 : f32 to vector<32x128xf32>
    %45 = arith.addf %43, %44 : vector<32x128xf32>
    %46 = arith.mulf %45, %38 : vector<32x128xf32>
    %cst_16 = arith.constant -0.284496725 : f32
    %47 = vector.broadcast %cst_16 : f32 to vector<32x128xf32>
    %48 = arith.addf %46, %47 : vector<32x128xf32>
    %49 = arith.mulf %48, %38 : vector<32x128xf32>
    %cst_17 = arith.constant 0.254829586 : f32
    %50 = vector.broadcast %cst_17 : f32 to vector<32x128xf32>
    %51 = arith.addf %49, %50 : vector<32x128xf32>
    %52 = arith.mulf %51, %38 : vector<32x128xf32>
    %cst_18 = arith.constant 0.000000e+00 : f32
    %53 = vector.broadcast %cst_18 : f32 to vector<32x128xf32>
    %54 = arith.subf %53, %29 : vector<32x128xf32>
    %55 = arith.mulf %54, %29 : vector<32x128xf32>
    %56 = math.exp %55 : vector<32x128xf32>
    %57 = arith.mulf %52, %56 : vector<32x128xf32>
    %cst_19 = arith.constant 1.000000e+00 : f32
    %58 = vector.broadcast %cst_19 : f32 to vector<32x128xf32>
    %59 = arith.subf %58, %57 : vector<32x128xf32>
    %cst_20 = arith.constant 0.000000e+00 : f32
    %60 = vector.broadcast %cst_20 : f32 to vector<32x128xf32>
    %61 = arith.cmpf oge, %28, %60 : vector<32x128xf32>
    %cst_21 = arith.constant 0.000000e+00 : f32
    %62 = vector.broadcast %cst_21 : f32 to vector<32x128xf32>
    %63 = arith.subf %62, %59 : vector<32x128xf32>
    %64 = arith.select %61, %59, %63 : vector<32x128xi1>, vector<32x128xf32>
    %cst_22 = arith.constant 5.000000e-01 : f32
    %65 = vector.broadcast %cst_22 : f32 to vector<32x128xf32>
    %66 = arith.mulf %65, %26 : vector<32x128xf32>
    %cst_23 = arith.constant 1.000000e+00 : f32
    %67 = vector.broadcast %cst_23 : f32 to vector<32x128xf32>
    %68 = arith.addf %67, %64 : vector<32x128xf32>
    %69 = arith.mulf %66, %68 : vector<32x128xf32>
    %c0_24 = arith.constant 0 : index
    %c0_25 = arith.constant 0 : index
    %c0_26 = arith.constant 0 : index
    %c0_27 = arith.constant 0 : index
    %70 = vector.load %arg3[%c0_24, %c0_25, %c0_26, %c0_27] : memref<2x2x32x96xf32, #tpu.memory_space<vmem>>, vector<1x1x32x96xf32>
    %71 = vector.shape_cast %70 : vector<1x1x32x96xf32> to vector<32x96xf32>
    %c0_28 = arith.constant 0 : index
    %c0_29 = arith.constant 0 : index
    %c0_30 = arith.constant 0 : index
    %c0_31 = arith.constant 0 : index
    %72 = vector.load %arg4[%c0_28, %c0_29, %c0_30, %c0_31] : memref<2x2x32x1xf32, #tpu.memory_space<vmem>>, vector<1x1x32x1xf32>
    %73 = vector.shape_cast %72 : vector<1x1x32x1xf32> to vector<32x1xf32>
    %c1_i32_32 = arith.constant 1 : i32
    %74 = tpu.dynamic_rotate %69 by %c1_i32_32 dim 1 : vector<32x128xf32>, i32 -> vector<32x128xf32>
    %cst_33 = arith.constant 0.000000e+00 : f32
    %75 = vector.shape_cast %18 : vector<1x128xi1> to vector<1x128xi1>
    %76 = vector.broadcast %75 : vector<1x128xi1> to vector<32x128xi1>
    %77 = vector.broadcast %cst_33 : f32 to vector<32x128xf32>
    %78 = arith.select %76, %74, %77 : vector<32x128xi1>, vector<32x128xf32>
    %c127_i32 = arith.constant 127 : i32
    %79 = tpu.dynamic_rotate %69 by %c127_i32 dim 1 : vector<32x128xf32>, i32 -> vector<32x128xf32>
    %cst_34 = arith.constant 0.000000e+00 : f32
    %80 = vector.shape_cast %20 : vector<1x128xi1> to vector<1x128xi1>
    %81 = vector.broadcast %80 : vector<1x128xi1> to vector<32x128xi1>
    %82 = vector.broadcast %cst_34 : f32 to vector<32x128xf32>
    %83 = arith.select %81, %79, %82 : vector<32x128xi1>, vector<32x128xf32>
    %84 = tpu.concatenate %78, %69, %83 in 0 : vector<32x128xf32>, vector<32x128xf32>, vector<32x128xf32> -> vector<96x128xf32>
    %cst_35 = arith.constant dense<0.000000e+00> : vector<32x128xf32>
    %85 = tpu.matmul %71, %84, %cst_35 {dimension_numbers = #tpu.dot_dimension_numbers<[1], [0], [0], [1], [0, 0, 1, 1], [], []>} : vector<32x96xf32>, vector<96x128xf32>, vector<32x128xf32> -> vector<32x128xf32>
    %86 = vector.broadcast %73 : vector<32x1xf32> to vector<32x128xf32>
    %87 = arith.addf %85, %86 : vector<32x128xf32>
    %c0_36 = arith.constant 0 : index
    %c0_37 = arith.constant 0 : index
    %c0_38 = arith.constant 0 : index
    %c0_39 = arith.constant 0 : index
    %88 = vector.load %arg5[%c0_36, %c0_37, %c0_38, %c0_39] : memref<2x2x32x1xf32, #tpu.memory_space<vmem>>, vector<1x1x32x1xf32>
    %89 = vector.shape_cast %88 : vector<1x1x32x1xf32> to vector<32x1xf32>
    %c0_40 = arith.constant 0 : index
    %c0_41 = arith.constant 0 : index
    %c0_42 = arith.constant 0 : index
    %c0_43 = arith.constant 0 : index
    %90 = vector.load %arg6[%c0_40, %c0_41, %c0_42, %c0_43] : memref<2x2x32x1xf32, #tpu.memory_space<vmem>>, vector<1x1x32x1xf32>
    %91 = vector.shape_cast %90 : vector<1x1x32x1xf32> to vector<32x1xf32>
    %cst_44 = arith.constant dense<0.000000e+00> : vector<32xf32>
    %92 = vector.multi_reduction <add>, %87, %cst_44 [1] : vector<32x128xf32> to vector<32xf32>
    %93 = vector.shape_cast %92 : vector<32xf32> to vector<32x1xf32>
    %94 = arith.mulf %87, %87 : vector<32x128xf32>
    %cst_45 = arith.constant dense<0.000000e+00> : vector<32xf32>
    %95 = vector.multi_reduction <add>, %94, %cst_45 [1] : vector<32x128xf32> to vector<32xf32>
    %96 = vector.shape_cast %95 : vector<32xf32> to vector<32x1xf32>
    %cst_46 = arith.constant 7.812500e-03 : f32
    %97 = vector.broadcast %cst_46 : f32 to vector<32x1xf32>
    %98 = arith.mulf %93, %97 : vector<32x1xf32>
    %cst_47 = arith.constant 7.812500e-03 : f32
    %99 = vector.broadcast %cst_47 : f32 to vector<32x1xf32>
    %100 = arith.mulf %96, %99 : vector<32x1xf32>
    %101 = arith.mulf %98, %98 : vector<32x1xf32>
    %102 = arith.subf %100, %101 : vector<32x1xf32>
    %103 = vector.broadcast %98 : vector<32x1xf32> to vector<32x128xf32>
    %104 = arith.subf %87, %103 : vector<32x128xf32>
    %cst_48 = arith.constant 9.99999974E-6 : f32
    %105 = vector.broadcast %cst_48 : f32 to vector<32x1xf32>
    %106 = arith.addf %102, %105 : vector<32x1xf32>
    %107 = math.rsqrt %106 : vector<32x1xf32>
    %108 = vector.broadcast %107 : vector<32x1xf32> to vector<32x128xf32>
    %109 = arith.mulf %104, %108 : vector<32x128xf32>
    %110 = vector.broadcast %89 : vector<32x1xf32> to vector<32x128xf32>
    %111 = arith.mulf %110, %109 : vector<32x128xf32>
    %112 = vector.broadcast %91 : vector<32x1xf32> to vector<32x128xf32>
    %113 = arith.addf %111, %112 : vector<32x128xf32>
    %cst_49 = arith.constant 0.707106769 : f32
    %114 = vector.broadcast %cst_49 : f32 to vector<32x128xf32>
    %115 = arith.mulf %113, %114 : vector<32x128xf32>
    %116 = math.absf %115 : vector<32x128xf32>
    %cst_50 = arith.constant 0.327591091 : f32
    %117 = vector.broadcast %cst_50 : f32 to vector<32x128xf32>
    %118 = arith.mulf %117, %116 : vector<32x128xf32>
    %cst_51 = arith.constant 1.000000e+00 : f32
    %119 = vector.broadcast %cst_51 : f32 to vector<32x128xf32>
    %120 = arith.addf %119, %118 : vector<32x128xf32>
    %121 = tpu.reciprocal %120 {approx = true} : vector<32x128xf32> -> vector<32x128xf32>
    %122 = arith.mulf %120, %121 : vector<32x128xf32>
    %cst_52 = arith.constant 2.000000e+00 : f32
    %123 = vector.broadcast %cst_52 : f32 to vector<32x128xf32>
    %124 = arith.subf %123, %122 : vector<32x128xf32>
    %125 = arith.mulf %121, %124 : vector<32x128xf32>
    %cst_53 = arith.constant 1.06140542 : f32
    %126 = vector.broadcast %cst_53 : f32 to vector<32x128xf32>
    %127 = arith.mulf %126, %125 : vector<32x128xf32>
    %cst_54 = arith.constant -1.45315206 : f32
    %128 = vector.broadcast %cst_54 : f32 to vector<32x128xf32>
    %129 = arith.addf %127, %128 : vector<32x128xf32>
    %130 = arith.mulf %129, %125 : vector<32x128xf32>
    %cst_55 = arith.constant 1.42141378 : f32
    %131 = vector.broadcast %cst_55 : f32 to vector<32x128xf32>
    %132 = arith.addf %130, %131 : vector<32x128xf32>
    %133 = arith.mulf %132, %125 : vector<32x128xf32>
    %cst_56 = arith.constant -0.284496725 : f32
    %134 = vector.broadcast %cst_56 : f32 to vector<32x128xf32>
    %135 = arith.addf %133, %134 : vector<32x128xf32>
    %136 = arith.mulf %135, %125 : vector<32x128xf32>
    %cst_57 = arith.constant 0.254829586 : f32
    %137 = vector.broadcast %cst_57 : f32 to vector<32x128xf32>
    %138 = arith.addf %136, %137 : vector<32x128xf32>
    %139 = arith.mulf %138, %125 : vector<32x128xf32>
    %cst_58 = arith.constant 0.000000e+00 : f32
    %140 = vector.broadcast %cst_58 : f32 to vector<32x128xf32>
    %141 = arith.subf %140, %116 : vector<32x128xf32>
    %142 = arith.mulf %141, %116 : vector<32x128xf32>
    %143 = math.exp %142 : vector<32x128xf32>
    %144 = arith.mulf %139, %143 : vector<32x128xf32>
    %cst_59 = arith.constant 1.000000e+00 : f32
    %145 = vector.broadcast %cst_59 : f32 to vector<32x128xf32>
    %146 = arith.subf %145, %144 : vector<32x128xf32>
    %cst_60 = arith.constant 0.000000e+00 : f32
    %147 = vector.broadcast %cst_60 : f32 to vector<32x128xf32>
    %148 = arith.cmpf oge, %115, %147 : vector<32x128xf32>
    %cst_61 = arith.constant 0.000000e+00 : f32
    %149 = vector.broadcast %cst_61 : f32 to vector<32x128xf32>
    %150 = arith.subf %149, %146 : vector<32x128xf32>
    %151 = arith.select %148, %146, %150 : vector<32x128xi1>, vector<32x128xf32>
    %cst_62 = arith.constant 5.000000e-01 : f32
    %152 = vector.broadcast %cst_62 : f32 to vector<32x128xf32>
    %153 = arith.mulf %152, %113 : vector<32x128xf32>
    %cst_63 = arith.constant 1.000000e+00 : f32
    %154 = vector.broadcast %cst_63 : f32 to vector<32x128xf32>
    %155 = arith.addf %154, %151 : vector<32x128xf32>
    %156 = arith.mulf %153, %155 : vector<32x128xf32>
    %c0_64 = arith.constant 0 : index
    %c1 = arith.constant 1 : index
    %c0_65 = arith.constant 0 : index
    %c0_66 = arith.constant 0 : index
    %157 = vector.load %arg3[%c0_64, %c1, %c0_65, %c0_66] : memref<2x2x32x96xf32, #tpu.memory_space<vmem>>, vector<1x1x32x96xf32>
    %158 = vector.shape_cast %157 : vector<1x1x32x96xf32> to vector<32x96xf32>
    %c0_67 = arith.constant 0 : index
    %c1_68 = arith.constant 1 : index
    %c0_69 = arith.constant 0 : index
    %c0_70 = arith.constant 0 : index
    %159 = vector.load %arg4[%c0_67, %c1_68, %c0_69, %c0_70] : memref<2x2x32x1xf32, #tpu.memory_space<vmem>>, vector<1x1x32x1xf32>
    %160 = vector.shape_cast %159 : vector<1x1x32x1xf32> to vector<32x1xf32>
    %c1_i32_71 = arith.constant 1 : i32
    %161 = tpu.dynamic_rotate %156 by %c1_i32_71 dim 1 : vector<32x128xf32>, i32 -> vector<32x128xf32>
    %cst_72 = arith.constant 0.000000e+00 : f32
    %162 = vector.shape_cast %18 : vector<1x128xi1> to vector<1x128xi1>
    %163 = vector.broadcast %162 : vector<1x128xi1> to vector<32x128xi1>
    %164 = vector.broadcast %cst_72 : f32 to vector<32x128xf32>
    %165 = arith.select %163, %161, %164 : vector<32x128xi1>, vector<32x128xf32>
    %c127_i32_73 = arith.constant 127 : i32
    %166 = tpu.dynamic_rotate %156 by %c127_i32_73 dim 1 : vector<32x128xf32>, i32 -> vector<32x128xf32>
    %cst_74 = arith.constant 0.000000e+00 : f32
    %167 = vector.shape_cast %20 : vector<1x128xi1> to vector<1x128xi1>
    %168 = vector.broadcast %167 : vector<1x128xi1> to vector<32x128xi1>
    %169 = vector.broadcast %cst_74 : f32 to vector<32x128xf32>
    %170 = arith.select %168, %166, %169 : vector<32x128xi1>, vector<32x128xf32>
    %171 = tpu.concatenate %165, %156, %170 in 0 : vector<32x128xf32>, vector<32x128xf32>, vector<32x128xf32> -> vector<96x128xf32>
    %cst_75 = arith.constant dense<0.000000e+00> : vector<32x128xf32>
    %172 = tpu.matmul %158, %171, %cst_75 {dimension_numbers = #tpu.dot_dimension_numbers<[1], [0], [0], [1], [0, 0, 1, 1], [], []>} : vector<32x96xf32>, vector<96x128xf32>, vector<32x128xf32> -> vector<32x128xf32>
    %173 = vector.broadcast %160 : vector<32x1xf32> to vector<32x128xf32>
    %174 = arith.addf %172, %173 : vector<32x128xf32>
    %c0_76 = arith.constant 0 : index
    %c1_77 = arith.constant 1 : index
    %c0_78 = arith.constant 0 : index
    %c0_79 = arith.constant 0 : index
    %175 = vector.load %arg5[%c0_76, %c1_77, %c0_78, %c0_79] : memref<2x2x32x1xf32, #tpu.memory_space<vmem>>, vector<1x1x32x1xf32>
    %176 = vector.shape_cast %175 : vector<1x1x32x1xf32> to vector<32x1xf32>
    %c0_80 = arith.constant 0 : index
    %c1_81 = arith.constant 1 : index
    %c0_82 = arith.constant 0 : index
    %c0_83 = arith.constant 0 : index
    %177 = vector.load %arg6[%c0_80, %c1_81, %c0_82, %c0_83] : memref<2x2x32x1xf32, #tpu.memory_space<vmem>>, vector<1x1x32x1xf32>
    %178 = vector.shape_cast %177 : vector<1x1x32x1xf32> to vector<32x1xf32>
    %cst_84 = arith.constant dense<0.000000e+00> : vector<32xf32>
    %179 = vector.multi_reduction <add>, %174, %cst_84 [1] : vector<32x128xf32> to vector<32xf32>
    %180 = vector.shape_cast %179 : vector<32xf32> to vector<32x1xf32>
    %181 = arith.mulf %174, %174 : vector<32x128xf32>
    %cst_85 = arith.constant dense<0.000000e+00> : vector<32xf32>
    %182 = vector.multi_reduction <add>, %181, %cst_85 [1] : vector<32x128xf32> to vector<32xf32>
    %183 = vector.shape_cast %182 : vector<32xf32> to vector<32x1xf32>
    %cst_86 = arith.constant 7.812500e-03 : f32
    %184 = vector.broadcast %cst_86 : f32 to vector<32x1xf32>
    %185 = arith.mulf %180, %184 : vector<32x1xf32>
    %cst_87 = arith.constant 7.812500e-03 : f32
    %186 = vector.broadcast %cst_87 : f32 to vector<32x1xf32>
    %187 = arith.mulf %183, %186 : vector<32x1xf32>
    %188 = arith.mulf %185, %185 : vector<32x1xf32>
    %189 = arith.subf %187, %188 : vector<32x1xf32>
    %190 = vector.broadcast %185 : vector<32x1xf32> to vector<32x128xf32>
    %191 = arith.subf %174, %190 : vector<32x128xf32>
    %cst_88 = arith.constant 9.99999974E-6 : f32
    %192 = vector.broadcast %cst_88 : f32 to vector<32x1xf32>
    %193 = arith.addf %189, %192 : vector<32x1xf32>
    %194 = math.rsqrt %193 : vector<32x1xf32>
    %195 = vector.broadcast %194 : vector<32x1xf32> to vector<32x128xf32>
    %196 = arith.mulf %191, %195 : vector<32x128xf32>
    %197 = vector.broadcast %176 : vector<32x1xf32> to vector<32x128xf32>
    %198 = arith.mulf %197, %196 : vector<32x128xf32>
    %199 = vector.broadcast %178 : vector<32x1xf32> to vector<32x128xf32>
    %200 = arith.addf %198, %199 : vector<32x128xf32>
    %201 = arith.addf %200, %69 : vector<32x128xf32>
    %cst_89 = arith.constant 0.707106769 : f32
    %202 = vector.broadcast %cst_89 : f32 to vector<32x128xf32>
    %203 = arith.mulf %201, %202 : vector<32x128xf32>
    %204 = math.absf %203 : vector<32x128xf32>
    %cst_90 = arith.constant 0.327591091 : f32
    %205 = vector.broadcast %cst_90 : f32 to vector<32x128xf32>
    %206 = arith.mulf %205, %204 : vector<32x128xf32>
    %cst_91 = arith.constant 1.000000e+00 : f32
    %207 = vector.broadcast %cst_91 : f32 to vector<32x128xf32>
    %208 = arith.addf %207, %206 : vector<32x128xf32>
    %209 = tpu.reciprocal %208 {approx = true} : vector<32x128xf32> -> vector<32x128xf32>
    %210 = arith.mulf %208, %209 : vector<32x128xf32>
    %cst_92 = arith.constant 2.000000e+00 : f32
    %211 = vector.broadcast %cst_92 : f32 to vector<32x128xf32>
    %212 = arith.subf %211, %210 : vector<32x128xf32>
    %213 = arith.mulf %209, %212 : vector<32x128xf32>
    %cst_93 = arith.constant 1.06140542 : f32
    %214 = vector.broadcast %cst_93 : f32 to vector<32x128xf32>
    %215 = arith.mulf %214, %213 : vector<32x128xf32>
    %cst_94 = arith.constant -1.45315206 : f32
    %216 = vector.broadcast %cst_94 : f32 to vector<32x128xf32>
    %217 = arith.addf %215, %216 : vector<32x128xf32>
    %218 = arith.mulf %217, %213 : vector<32x128xf32>
    %cst_95 = arith.constant 1.42141378 : f32
    %219 = vector.broadcast %cst_95 : f32 to vector<32x128xf32>
    %220 = arith.addf %218, %219 : vector<32x128xf32>
    %221 = arith.mulf %220, %213 : vector<32x128xf32>
    %cst_96 = arith.constant -0.284496725 : f32
    %222 = vector.broadcast %cst_96 : f32 to vector<32x128xf32>
    %223 = arith.addf %221, %222 : vector<32x128xf32>
    %224 = arith.mulf %223, %213 : vector<32x128xf32>
    %cst_97 = arith.constant 0.254829586 : f32
    %225 = vector.broadcast %cst_97 : f32 to vector<32x128xf32>
    %226 = arith.addf %224, %225 : vector<32x128xf32>
    %227 = arith.mulf %226, %213 : vector<32x128xf32>
    %cst_98 = arith.constant 0.000000e+00 : f32
    %228 = vector.broadcast %cst_98 : f32 to vector<32x128xf32>
    %229 = arith.subf %228, %204 : vector<32x128xf32>
    %230 = arith.mulf %229, %204 : vector<32x128xf32>
    %231 = math.exp %230 : vector<32x128xf32>
    %232 = arith.mulf %227, %231 : vector<32x128xf32>
    %cst_99 = arith.constant 1.000000e+00 : f32
    %233 = vector.broadcast %cst_99 : f32 to vector<32x128xf32>
    %234 = arith.subf %233, %232 : vector<32x128xf32>
    %cst_100 = arith.constant 0.000000e+00 : f32
    %235 = vector.broadcast %cst_100 : f32 to vector<32x128xf32>
    %236 = arith.cmpf oge, %203, %235 : vector<32x128xf32>
    %cst_101 = arith.constant 0.000000e+00 : f32
    %237 = vector.broadcast %cst_101 : f32 to vector<32x128xf32>
    %238 = arith.subf %237, %234 : vector<32x128xf32>
    %239 = arith.select %236, %234, %238 : vector<32x128xi1>, vector<32x128xf32>
    %cst_102 = arith.constant 5.000000e-01 : f32
    %240 = vector.broadcast %cst_102 : f32 to vector<32x128xf32>
    %241 = arith.mulf %240, %201 : vector<32x128xf32>
    %cst_103 = arith.constant 1.000000e+00 : f32
    %242 = vector.broadcast %cst_103 : f32 to vector<32x128xf32>
    %243 = arith.addf %242, %239 : vector<32x128xf32>
    %244 = arith.mulf %241, %243 : vector<32x128xf32>
    %c1_104 = arith.constant 1 : index
    %c0_105 = arith.constant 0 : index
    %c0_106 = arith.constant 0 : index
    %c0_107 = arith.constant 0 : index
    %245 = vector.load %arg3[%c1_104, %c0_105, %c0_106, %c0_107] : memref<2x2x32x96xf32, #tpu.memory_space<vmem>>, vector<1x1x32x96xf32>
    %246 = vector.shape_cast %245 : vector<1x1x32x96xf32> to vector<32x96xf32>
    %c1_108 = arith.constant 1 : index
    %c0_109 = arith.constant 0 : index
    %c0_110 = arith.constant 0 : index
    %c0_111 = arith.constant 0 : index
    %247 = vector.load %arg4[%c1_108, %c0_109, %c0_110, %c0_111] : memref<2x2x32x1xf32, #tpu.memory_space<vmem>>, vector<1x1x32x1xf32>
    %248 = vector.shape_cast %247 : vector<1x1x32x1xf32> to vector<32x1xf32>
    %c1_i32_112 = arith.constant 1 : i32
    %249 = tpu.dynamic_rotate %244 by %c1_i32_112 dim 1 : vector<32x128xf32>, i32 -> vector<32x128xf32>
    %cst_113 = arith.constant 0.000000e+00 : f32
    %250 = vector.shape_cast %18 : vector<1x128xi1> to vector<1x128xi1>
    %251 = vector.broadcast %250 : vector<1x128xi1> to vector<32x128xi1>
    %252 = vector.broadcast %cst_113 : f32 to vector<32x128xf32>
    %253 = arith.select %251, %249, %252 : vector<32x128xi1>, vector<32x128xf32>
    %c127_i32_114 = arith.constant 127 : i32
    %254 = tpu.dynamic_rotate %244 by %c127_i32_114 dim 1 : vector<32x128xf32>, i32 -> vector<32x128xf32>
    %cst_115 = arith.constant 0.000000e+00 : f32
    %255 = vector.shape_cast %20 : vector<1x128xi1> to vector<1x128xi1>
    %256 = vector.broadcast %255 : vector<1x128xi1> to vector<32x128xi1>
    %257 = vector.broadcast %cst_115 : f32 to vector<32x128xf32>
    %258 = arith.select %256, %254, %257 : vector<32x128xi1>, vector<32x128xf32>
    %259 = tpu.concatenate %253, %244, %258 in 0 : vector<32x128xf32>, vector<32x128xf32>, vector<32x128xf32> -> vector<96x128xf32>
    %cst_116 = arith.constant dense<0.000000e+00> : vector<32x128xf32>
    %260 = tpu.matmul %246, %259, %cst_116 {dimension_numbers = #tpu.dot_dimension_numbers<[1], [0], [0], [1], [0, 0, 1, 1], [], []>} : vector<32x96xf32>, vector<96x128xf32>, vector<32x128xf32> -> vector<32x128xf32>
    %261 = vector.broadcast %248 : vector<32x1xf32> to vector<32x128xf32>
    %262 = arith.addf %260, %261 : vector<32x128xf32>
    %c1_117 = arith.constant 1 : index
    %c0_118 = arith.constant 0 : index
    %c0_119 = arith.constant 0 : index
    %c0_120 = arith.constant 0 : index
    %263 = vector.load %arg5[%c1_117, %c0_118, %c0_119, %c0_120] : memref<2x2x32x1xf32, #tpu.memory_space<vmem>>, vector<1x1x32x1xf32>
    %264 = vector.shape_cast %263 : vector<1x1x32x1xf32> to vector<32x1xf32>
    %c1_121 = arith.constant 1 : index
    %c0_122 = arith.constant 0 : index
    %c0_123 = arith.constant 0 : index
    %c0_124 = arith.constant 0 : index
    %265 = vector.load %arg6[%c1_121, %c0_122, %c0_123, %c0_124] : memref<2x2x32x1xf32, #tpu.memory_space<vmem>>, vector<1x1x32x1xf32>
    %266 = vector.shape_cast %265 : vector<1x1x32x1xf32> to vector<32x1xf32>
    %cst_125 = arith.constant dense<0.000000e+00> : vector<32xf32>
    %267 = vector.multi_reduction <add>, %262, %cst_125 [1] : vector<32x128xf32> to vector<32xf32>
    %268 = vector.shape_cast %267 : vector<32xf32> to vector<32x1xf32>
    %269 = arith.mulf %262, %262 : vector<32x128xf32>
    %cst_126 = arith.constant dense<0.000000e+00> : vector<32xf32>
    %270 = vector.multi_reduction <add>, %269, %cst_126 [1] : vector<32x128xf32> to vector<32xf32>
    %271 = vector.shape_cast %270 : vector<32xf32> to vector<32x1xf32>
    %cst_127 = arith.constant 7.812500e-03 : f32
    %272 = vector.broadcast %cst_127 : f32 to vector<32x1xf32>
    %273 = arith.mulf %268, %272 : vector<32x1xf32>
    %cst_128 = arith.constant 7.812500e-03 : f32
    %274 = vector.broadcast %cst_128 : f32 to vector<32x1xf32>
    %275 = arith.mulf %271, %274 : vector<32x1xf32>
    %276 = arith.mulf %273, %273 : vector<32x1xf32>
    %277 = arith.subf %275, %276 : vector<32x1xf32>
    %278 = vector.broadcast %273 : vector<32x1xf32> to vector<32x128xf32>
    %279 = arith.subf %262, %278 : vector<32x128xf32>
    %cst_129 = arith.constant 9.99999974E-6 : f32
    %280 = vector.broadcast %cst_129 : f32 to vector<32x1xf32>
    %281 = arith.addf %277, %280 : vector<32x1xf32>
    %282 = math.rsqrt %281 : vector<32x1xf32>
    %283 = vector.broadcast %282 : vector<32x1xf32> to vector<32x128xf32>
    %284 = arith.mulf %279, %283 : vector<32x128xf32>
    %285 = vector.broadcast %264 : vector<32x1xf32> to vector<32x128xf32>
    %286 = arith.mulf %285, %284 : vector<32x128xf32>
    %287 = vector.broadcast %266 : vector<32x1xf32> to vector<32x128xf32>
    %288 = arith.addf %286, %287 : vector<32x128xf32>
    %cst_130 = arith.constant 0.707106769 : f32
    %289 = vector.broadcast %cst_130 : f32 to vector<32x128xf32>
    %290 = arith.mulf %288, %289 : vector<32x128xf32>
    %291 = math.absf %290 : vector<32x128xf32>
    %cst_131 = arith.constant 0.327591091 : f32
    %292 = vector.broadcast %cst_131 : f32 to vector<32x128xf32>
    %293 = arith.mulf %292, %291 : vector<32x128xf32>
    %cst_132 = arith.constant 1.000000e+00 : f32
    %294 = vector.broadcast %cst_132 : f32 to vector<32x128xf32>
    %295 = arith.addf %294, %293 : vector<32x128xf32>
    %296 = tpu.reciprocal %295 {approx = true} : vector<32x128xf32> -> vector<32x128xf32>
    %297 = arith.mulf %295, %296 : vector<32x128xf32>
    %cst_133 = arith.constant 2.000000e+00 : f32
    %298 = vector.broadcast %cst_133 : f32 to vector<32x128xf32>
    %299 = arith.subf %298, %297 : vector<32x128xf32>
    %300 = arith.mulf %296, %299 : vector<32x128xf32>
    %cst_134 = arith.constant 1.06140542 : f32
    %301 = vector.broadcast %cst_134 : f32 to vector<32x128xf32>
    %302 = arith.mulf %301, %300 : vector<32x128xf32>
    %cst_135 = arith.constant -1.45315206 : f32
    %303 = vector.broadcast %cst_135 : f32 to vector<32x128xf32>
    %304 = arith.addf %302, %303 : vector<32x128xf32>
    %305 = arith.mulf %304, %300 : vector<32x128xf32>
    %cst_136 = arith.constant 1.42141378 : f32
    %306 = vector.broadcast %cst_136 : f32 to vector<32x128xf32>
    %307 = arith.addf %305, %306 : vector<32x128xf32>
    %308 = arith.mulf %307, %300 : vector<32x128xf32>
    %cst_137 = arith.constant -0.284496725 : f32
    %309 = vector.broadcast %cst_137 : f32 to vector<32x128xf32>
    %310 = arith.addf %308, %309 : vector<32x128xf32>
    %311 = arith.mulf %310, %300 : vector<32x128xf32>
    %cst_138 = arith.constant 0.254829586 : f32
    %312 = vector.broadcast %cst_138 : f32 to vector<32x128xf32>
    %313 = arith.addf %311, %312 : vector<32x128xf32>
    %314 = arith.mulf %313, %300 : vector<32x128xf32>
    %cst_139 = arith.constant 0.000000e+00 : f32
    %315 = vector.broadcast %cst_139 : f32 to vector<32x128xf32>
    %316 = arith.subf %315, %291 : vector<32x128xf32>
    %317 = arith.mulf %316, %291 : vector<32x128xf32>
    %318 = math.exp %317 : vector<32x128xf32>
    %319 = arith.mulf %314, %318 : vector<32x128xf32>
    %cst_140 = arith.constant 1.000000e+00 : f32
    %320 = vector.broadcast %cst_140 : f32 to vector<32x128xf32>
    %321 = arith.subf %320, %319 : vector<32x128xf32>
    %cst_141 = arith.constant 0.000000e+00 : f32
    %322 = vector.broadcast %cst_141 : f32 to vector<32x128xf32>
    %323 = arith.cmpf oge, %290, %322 : vector<32x128xf32>
    %cst_142 = arith.constant 0.000000e+00 : f32
    %324 = vector.broadcast %cst_142 : f32 to vector<32x128xf32>
    %325 = arith.subf %324, %321 : vector<32x128xf32>
    %326 = arith.select %323, %321, %325 : vector<32x128xi1>, vector<32x128xf32>
    %cst_143 = arith.constant 5.000000e-01 : f32
    %327 = vector.broadcast %cst_143 : f32 to vector<32x128xf32>
    %328 = arith.mulf %327, %288 : vector<32x128xf32>
    %cst_144 = arith.constant 1.000000e+00 : f32
    %329 = vector.broadcast %cst_144 : f32 to vector<32x128xf32>
    %330 = arith.addf %329, %326 : vector<32x128xf32>
    %331 = arith.mulf %328, %330 : vector<32x128xf32>
    %c1_145 = arith.constant 1 : index
    %c1_146 = arith.constant 1 : index
    %c0_147 = arith.constant 0 : index
    %c0_148 = arith.constant 0 : index
    %332 = vector.load %arg3[%c1_145, %c1_146, %c0_147, %c0_148] : memref<2x2x32x96xf32, #tpu.memory_space<vmem>>, vector<1x1x32x96xf32>
    %333 = vector.shape_cast %332 : vector<1x1x32x96xf32> to vector<32x96xf32>
    %c1_149 = arith.constant 1 : index
    %c1_150 = arith.constant 1 : index
    %c0_151 = arith.constant 0 : index
    %c0_152 = arith.constant 0 : index
    %334 = vector.load %arg4[%c1_149, %c1_150, %c0_151, %c0_152] : memref<2x2x32x1xf32, #tpu.memory_space<vmem>>, vector<1x1x32x1xf32>
    %335 = vector.shape_cast %334 : vector<1x1x32x1xf32> to vector<32x1xf32>
    %c1_i32_153 = arith.constant 1 : i32
    %336 = tpu.dynamic_rotate %331 by %c1_i32_153 dim 1 : vector<32x128xf32>, i32 -> vector<32x128xf32>
    %cst_154 = arith.constant 0.000000e+00 : f32
    %337 = vector.shape_cast %18 : vector<1x128xi1> to vector<1x128xi1>
    %338 = vector.broadcast %337 : vector<1x128xi1> to vector<32x128xi1>
    %339 = vector.broadcast %cst_154 : f32 to vector<32x128xf32>
    %340 = arith.select %338, %336, %339 : vector<32x128xi1>, vector<32x128xf32>
    %c127_i32_155 = arith.constant 127 : i32
    %341 = tpu.dynamic_rotate %331 by %c127_i32_155 dim 1 : vector<32x128xf32>, i32 -> vector<32x128xf32>
    %cst_156 = arith.constant 0.000000e+00 : f32
    %342 = vector.shape_cast %20 : vector<1x128xi1> to vector<1x128xi1>
    %343 = vector.broadcast %342 : vector<1x128xi1> to vector<32x128xi1>
    %344 = vector.broadcast %cst_156 : f32 to vector<32x128xf32>
    %345 = arith.select %343, %341, %344 : vector<32x128xi1>, vector<32x128xf32>
    %346 = tpu.concatenate %340, %331, %345 in 0 : vector<32x128xf32>, vector<32x128xf32>, vector<32x128xf32> -> vector<96x128xf32>
    %cst_157 = arith.constant dense<0.000000e+00> : vector<32x128xf32>
    %347 = tpu.matmul %333, %346, %cst_157 {dimension_numbers = #tpu.dot_dimension_numbers<[1], [0], [0], [1], [0, 0, 1, 1], [], []>} : vector<32x96xf32>, vector<96x128xf32>, vector<32x128xf32> -> vector<32x128xf32>
    %348 = vector.broadcast %335 : vector<32x1xf32> to vector<32x128xf32>
    %349 = arith.addf %347, %348 : vector<32x128xf32>
    %c1_158 = arith.constant 1 : index
    %c1_159 = arith.constant 1 : index
    %c0_160 = arith.constant 0 : index
    %c0_161 = arith.constant 0 : index
    %350 = vector.load %arg5[%c1_158, %c1_159, %c0_160, %c0_161] : memref<2x2x32x1xf32, #tpu.memory_space<vmem>>, vector<1x1x32x1xf32>
    %351 = vector.shape_cast %350 : vector<1x1x32x1xf32> to vector<32x1xf32>
    %c1_162 = arith.constant 1 : index
    %c1_163 = arith.constant 1 : index
    %c0_164 = arith.constant 0 : index
    %c0_165 = arith.constant 0 : index
    %352 = vector.load %arg6[%c1_162, %c1_163, %c0_164, %c0_165] : memref<2x2x32x1xf32, #tpu.memory_space<vmem>>, vector<1x1x32x1xf32>
    %353 = vector.shape_cast %352 : vector<1x1x32x1xf32> to vector<32x1xf32>
    %cst_166 = arith.constant dense<0.000000e+00> : vector<32xf32>
    %354 = vector.multi_reduction <add>, %349, %cst_166 [1] : vector<32x128xf32> to vector<32xf32>
    %355 = vector.shape_cast %354 : vector<32xf32> to vector<32x1xf32>
    %356 = arith.mulf %349, %349 : vector<32x128xf32>
    %cst_167 = arith.constant dense<0.000000e+00> : vector<32xf32>
    %357 = vector.multi_reduction <add>, %356, %cst_167 [1] : vector<32x128xf32> to vector<32xf32>
    %358 = vector.shape_cast %357 : vector<32xf32> to vector<32x1xf32>
    %cst_168 = arith.constant 7.812500e-03 : f32
    %359 = vector.broadcast %cst_168 : f32 to vector<32x1xf32>
    %360 = arith.mulf %355, %359 : vector<32x1xf32>
    %cst_169 = arith.constant 7.812500e-03 : f32
    %361 = vector.broadcast %cst_169 : f32 to vector<32x1xf32>
    %362 = arith.mulf %358, %361 : vector<32x1xf32>
    %363 = arith.mulf %360, %360 : vector<32x1xf32>
    %364 = arith.subf %362, %363 : vector<32x1xf32>
    %365 = vector.broadcast %360 : vector<32x1xf32> to vector<32x128xf32>
    %366 = arith.subf %349, %365 : vector<32x128xf32>
    %cst_170 = arith.constant 9.99999974E-6 : f32
    %367 = vector.broadcast %cst_170 : f32 to vector<32x1xf32>
    %368 = arith.addf %364, %367 : vector<32x1xf32>
    %369 = math.rsqrt %368 : vector<32x1xf32>
    %370 = vector.broadcast %369 : vector<32x1xf32> to vector<32x128xf32>
    %371 = arith.mulf %366, %370 : vector<32x128xf32>
    %372 = vector.broadcast %351 : vector<32x1xf32> to vector<32x128xf32>
    %373 = arith.mulf %372, %371 : vector<32x128xf32>
    %374 = vector.broadcast %353 : vector<32x1xf32> to vector<32x128xf32>
    %375 = arith.addf %373, %374 : vector<32x128xf32>
    %376 = arith.addf %375, %244 : vector<32x128xf32>
    %cst_171 = arith.constant 0.707106769 : f32
    %377 = vector.broadcast %cst_171 : f32 to vector<32x128xf32>
    %378 = arith.mulf %376, %377 : vector<32x128xf32>
    %379 = math.absf %378 : vector<32x128xf32>
    %cst_172 = arith.constant 0.327591091 : f32
    %380 = vector.broadcast %cst_172 : f32 to vector<32x128xf32>
    %381 = arith.mulf %380, %379 : vector<32x128xf32>
    %cst_173 = arith.constant 1.000000e+00 : f32
    %382 = vector.broadcast %cst_173 : f32 to vector<32x128xf32>
    %383 = arith.addf %382, %381 : vector<32x128xf32>
    %384 = tpu.reciprocal %383 {approx = true} : vector<32x128xf32> -> vector<32x128xf32>
    %385 = arith.mulf %383, %384 : vector<32x128xf32>
    %cst_174 = arith.constant 2.000000e+00 : f32
    %386 = vector.broadcast %cst_174 : f32 to vector<32x128xf32>
    %387 = arith.subf %386, %385 : vector<32x128xf32>
    %388 = arith.mulf %384, %387 : vector<32x128xf32>
    %cst_175 = arith.constant 1.06140542 : f32
    %389 = vector.broadcast %cst_175 : f32 to vector<32x128xf32>
    %390 = arith.mulf %389, %388 : vector<32x128xf32>
    %cst_176 = arith.constant -1.45315206 : f32
    %391 = vector.broadcast %cst_176 : f32 to vector<32x128xf32>
    %392 = arith.addf %390, %391 : vector<32x128xf32>
    %393 = arith.mulf %392, %388 : vector<32x128xf32>
    %cst_177 = arith.constant 1.42141378 : f32
    %394 = vector.broadcast %cst_177 : f32 to vector<32x128xf32>
    %395 = arith.addf %393, %394 : vector<32x128xf32>
    %396 = arith.mulf %395, %388 : vector<32x128xf32>
    %cst_178 = arith.constant -0.284496725 : f32
    %397 = vector.broadcast %cst_178 : f32 to vector<32x128xf32>
    %398 = arith.addf %396, %397 : vector<32x128xf32>
    %399 = arith.mulf %398, %388 : vector<32x128xf32>
    %cst_179 = arith.constant 0.254829586 : f32
    %400 = vector.broadcast %cst_179 : f32 to vector<32x128xf32>
    %401 = arith.addf %399, %400 : vector<32x128xf32>
    %402 = arith.mulf %401, %388 : vector<32x128xf32>
    %cst_180 = arith.constant 0.000000e+00 : f32
    %403 = vector.broadcast %cst_180 : f32 to vector<32x128xf32>
    %404 = arith.subf %403, %379 : vector<32x128xf32>
    %405 = arith.mulf %404, %379 : vector<32x128xf32>
    %406 = math.exp %405 : vector<32x128xf32>
    %407 = arith.mulf %402, %406 : vector<32x128xf32>
    %cst_181 = arith.constant 1.000000e+00 : f32
    %408 = vector.broadcast %cst_181 : f32 to vector<32x128xf32>
    %409 = arith.subf %408, %407 : vector<32x128xf32>
    %cst_182 = arith.constant 0.000000e+00 : f32
    %410 = vector.broadcast %cst_182 : f32 to vector<32x128xf32>
    %411 = arith.cmpf oge, %378, %410 : vector<32x128xf32>
    %cst_183 = arith.constant 0.000000e+00 : f32
    %412 = vector.broadcast %cst_183 : f32 to vector<32x128xf32>
    %413 = arith.subf %412, %409 : vector<32x128xf32>
    %414 = arith.select %411, %409, %413 : vector<32x128xi1>, vector<32x128xf32>
    %cst_184 = arith.constant 5.000000e-01 : f32
    %415 = vector.broadcast %cst_184 : f32 to vector<32x128xf32>
    %416 = arith.mulf %415, %376 : vector<32x128xf32>
    %cst_185 = arith.constant 1.000000e+00 : f32
    %417 = vector.broadcast %cst_185 : f32 to vector<32x128xf32>
    %418 = arith.addf %417, %414 : vector<32x128xf32>
    %419 = arith.mulf %416, %418 : vector<32x128xf32>
    %c0_186 = arith.constant 0 : index
    %c0_187 = arith.constant 0 : index
    %420 = vector.load %arg7[%c0_186, %c0_187] : memref<16x32xf32, #tpu.memory_space<vmem>>, vector<16x32xf32>
    %cst_188 = arith.constant dense<0.000000e+00> : vector<16x128xf32>
    %421 = tpu.matmul %420, %419, %cst_188 {dimension_numbers = #tpu.dot_dimension_numbers<[1], [0], [0], [1], [0, 0, 1, 1], [], []>} : vector<16x32xf32>, vector<32x128xf32>, vector<16x128xf32> -> vector<16x128xf32>
    %c0_189 = arith.constant 0 : index
    %c0_190 = arith.constant 0 : index
    %422 = vector.load %arg8[%c0_189, %c0_190] : memref<16x1xf32, #tpu.memory_space<vmem>>, vector<16x1xf32>
    %423 = vector.broadcast %422 : vector<16x1xf32> to vector<16x128xf32>
    %424 = arith.addf %421, %423 : vector<16x128xf32>
    %c0_191 = arith.constant 0 : index
    %c0_192 = arith.constant 0 : index
    %425 = vector.load %arg9[%c0_191, %c0_192] : memref<16x128xf32, #tpu.memory_space<vmem>>, vector<16x128xf32>
    tpu.vector_store %arg9[%c0_191, %c0_192], %424 {strides = array<i32>} : memref<16x128xf32, #tpu.memory_space<vmem>>, vector<16x128xf32>,
    return
  }
}

</mosaic_0001>

<llo_original>
// kernel: tpu_custom_call.1
$region0: #{tpu_custom_call.1}
  #allocation0 [shape = 'u32[]', space=smem, size = 0x4, offset = 0x4, fixed_abs, tag = 'smem constant byte address 0x4 - core index']
  #allocation1 [shape = 'u32[144,128]{1,0:T(1,128)}', space=vmem, size = 0x12000, scoped, tag = 'internal scratch']
  %s0 = inlined_call_operand.vmem [shape: f32[4,128], index: 0, kind: input, shape index: {}]
  %s1 = inlined_call_operand.vmem [shape: f32[32,4], index: 1, kind: input, shape index: {}]
  %s2 = inlined_call_operand.vmem [shape: f32[32,1], index: 2, kind: input, shape index: {}]
  %s3 = inlined_call_operand.vmem [shape: f32[2,2,32,96], index: 3, kind: input, shape index: {}]
  %s4 = inlined_call_operand.vmem [shape: f32[2,2,32,1], index: 4, kind: input, shape index: {}]
  %s5 = inlined_call_operand.vmem [shape: f32[2,2,32,1], index: 5, kind: input, shape index: {}]
  %s6 = inlined_call_operand.vmem [shape: f32[2,2,32,1], index: 6, kind: input, shape index: {}]
  %s7 = inlined_call_operand.vmem [shape: f32[16,32], index: 7, kind: input, shape index: {}]
  %s8 = inlined_call_operand.vmem [shape: f32[16,1], index: 8, kind: input, shape index: {}]
  %s9 = inlined_call_operand.hbm [shape: f32[16,128], index: 9, kind: output, shape index: {}]
  %s10 = sld [smem:[#allocation0]]
  $region46: #{tpu_custom_call.1} parent=0
    _
  %s12 = ssub.s32 1, %s10
  %s13 = scalar_select 0, %s12, %s10
  $region1: #{tpu_custom_call.1} parent=0
    #allocation2 [shape = 'u8[8192]{0}', space=vmem, size = 0x2000, scoped, tag = 'output window, operand 0, single buffered']
    #allocation3 [shape = 's32[1]{0}', space=sflag, size = 0x4, scoped, tag = 'scoped memory for tpu_custom_call.1']
    %14 = vsyncpa [#allocation3], 0
    // Predicated region
    $region2: #{tpu_custom_call.1} parent=1 // pred_check
      _
    $region3: #{tpu_custom_call.1} parent=1 // pred_check_branch
      %16 = sbr.rel (0) target = $region5
    $region4: #{tpu_custom_call.1} parent=1 // pred_region
      _
    $region5: #{tpu_custom_call.1} parent=1 // pred_fallthru
      _
    // Predicated region
    $region6: #{tpu_custom_call.1} parent=1 // pred_check
      _
    $region7: #{tpu_custom_call.1} parent=1 // pred_check_branch
      %18 = sbr.rel (0) target = $region9
    $region8: #{tpu_custom_call.1} parent=1 // pred_region
      _
    $region9: #{tpu_custom_call.1} parent=1 // pred_fallthru
      _
    // Predicated region
    $region10: #{tpu_custom_call.1} parent=1 // pred_check
      _
    $region11: #{tpu_custom_call.1} parent=1 // pred_check_branch
      %20 = sbr.rel (0) target = $region13
    $region12: #{tpu_custom_call.1} parent=1 // pred_region
      _
    $region13: #{tpu_custom_call.1} parent=1 // pred_fallthru
      _
    // Predicated region
    $region14: #{tpu_custom_call.1} parent=1 // pred_check
      _
    $region15: #{tpu_custom_call.1} parent=1 // pred_check_branch
      %22 = sbr.rel (0) target = $region17
    $region16: #{tpu_custom_call.1} parent=1 // pred_region
      _
    $region17: #{tpu_custom_call.1} parent=1 // pred_fallthru
      _
    // Predicated region
    $region18: #{tpu_custom_call.1} parent=1 // pred_check
      _
    $region19: #{tpu_custom_call.1} parent=1 // pred_check_branch
      %24 = sbr.rel (0) target = $region21
    $region20: #{tpu_custom_call.1} parent=1 // pred_region
      _
    $region21: #{tpu_custom_call.1} parent=1 // pred_fallthru
      _
    // Predicated region
    $region22: #{tpu_custom_call.1} parent=1 // pred_check
      _
    $region23: #{tpu_custom_call.1} parent=1 // pred_check_branch
      %26 = sbr.rel (0) target = $region25
    $region24: #{tpu_custom_call.1} parent=1 // pred_region
      _
    $region25: #{tpu_custom_call.1} parent=1 // pred_fallthru
      _
    // Predicated region
    $region26: #{tpu_custom_call.1} parent=1 // pred_check
      _
    $region27: #{tpu_custom_call.1} parent=1 // pred_check_branch
      %28 = sbr.rel (0) target = $region29
    $region28: #{tpu_custom_call.1} parent=1 // pred_region
      _
    $region29: #{tpu_custom_call.1} parent=1 // pred_fallthru
      _
    // Predicated region
    $region30: #{tpu_custom_call.1} parent=1 // pred_check
      _
    $region31: #{tpu_custom_call.1} parent=1 // pred_check_branch
      %30 = sbr.rel (0) target = $region33
    $region32: #{tpu_custom_call.1} parent=1 // pred_region
      _
    $region33: #{tpu_custom_call.1} parent=1 // pred_fallthru
      _
    // Predicated region
    $region34: #{tpu_custom_call.1} parent=1 // pred_check
      _
    $region35: #{tpu_custom_call.1} parent=1 // pred_check_branch
      %32 = sbr.rel (0) target = $region37
    $region36: #{tpu_custom_call.1} parent=1 // pred_region
      _
    $region37: #{tpu_custom_call.1} parent=1 // pred_fallthru
      _
    %v33 = vlaneseq
    %v34 = vand.u32 %v33, 127
    %vm35 = vcmp.lt.s32.totalorder %v34, 0
    %v36 = vsub.s32 0, %v34
    %v37 = vsel %vm35, %v36, %v34
    %v38 = vshrl.u32 %v37, 6
    %v39 = vand.u32 %v37, 63
    %v40 = vsub.s32 0, %v39
    %v41 = vsel %vm35, %v40, %v39
    %vm42 = vcmp.ne.s32.totalorder %v41, 0
    %vm43 = vcmp.lt.s32.totalorder %v41, 0
    %vm44 = vmand %vm43, %vm42
    %v45 = vadd.s32 %v41, 64
    %v46 = vsel %vm44, %v45, %v41
    %vm47 = vcmp.gt.s32.totalorder %v46, 0
    %vm48 = vcmp.lt.s32.totalorder %v46, 63
    %v49 = vld [vmem:[%s0] sm:$0xf]
    %v50 = vld [vmem:[%s1] sm:$0xff]
    %v51 = vld [vmem:[%s1 + $0x8] sm:$0xff]
    %v52 = vld [vmem:[%s1 + $0x10] sm:$0xff]
    %v53 = vld [vmem:[%s1 + $0x18] sm:$0xff]
    %v54 = vld [vmem:[%s2] sm:$0xff]
    %v55 = vld [vmem:[%s2 + $0x8] sm:$0xff]
    %v56 = vld [vmem:[%s2 + $0x10] sm:$0xff]
    %v57 = vld [vmem:[%s2 + $0x18] sm:$0xff]
    %59 = vset.pattern.permute.xlu0 0
    %60 = vperm.xlu0 %59, %v54
    %v61 = vpop.permute.xlu0 %60
    %64 = vset.pattern.permute.xlu0 0
    %65 = vperm.xlu0 %64, %v55
    %v66 = vpop.permute.xlu0 %65
    %69 = vset.pattern.permute.xlu0 0
    %70 = vperm.xlu0 %69, %v56
    %v71 = vpop.permute.xlu0 %70
    %74 = vset.pattern.permute.xlu0 0
    %75 = vperm.xlu0 %74, %v57
    %v76 = vpop.permute.xlu0 %75
    %vm78 = vcmask 31744
    %v80 = vsel %vm78, %v50, 0
    %v83 = vsel %vm78, %v51, 0
    %v86 = vsel %vm78, %v52, 0
    %v89 = vsel %vm78, %v53, 0
    %vm91 = vcmask 1043456
    %v93 = vsel %vm91, %v49, 0
    %95 = vmatprep.subr.mxu0 0.0
    %96 = vmatpush1.msra.mxu0 %v93
    %97 = vmatprep.subr.mxu0 0.0
    %98 = vmatpush1.msra.mxu0 0.0
    %99 = vmatprep.subr.mxu0 0.0
    %100 = vmatpush1.msra.mxu0 0.0
    %101 = vmatprep.subr.mxu0 0.0
    %102 = vmatpush1.msra.mxu0 0.0
    %103 = vmatprep.subr.mxu0 0.0
    %104 = vmatpush1.msra.mxu0 0.0
    %105 = vmatprep.subr.mxu0 0.0
    %106 = vmatpush1.msra.mxu0 0.0
    %107 = vmatprep.subr.mxu0 0.0
    %108 = vmatpush1.msra.mxu0 0.0
    %109 = vmatprep.subr.mxu0 0.0
    %110 = vmatpush1.msra.mxu0 0.0
    %111 = vmatprep.subr.mxu0 0.0
    %112 = vmatpush1.msra.mxu0 0.0
    %113 = vmatprep.subr.mxu0 0.0
    %114 = vmatpush1.msra.mxu0 0.0
    %115 = vmatprep.subr.mxu0 0.0
    %116 = vmatpush1.msra.mxu0 0.0
    %117 = vmatprep.subr.mxu0 0.0
    %118 = vmatpush1.msra.mxu0 0.0
    %119 = vmatprep.subr.mxu0 0.0
    %120 = vmatpush1.msra.mxu0 0.0
    %121 = vmatprep.subr.mxu0 0.0
    %122 = vmatpush1.msra.mxu0 0.0
    %123 = vmatprep.subr.mxu0 0.0
    %124 = vmatpush1.msra.mxu0 0.0
    %125 = vmatprep.subr.mxu0 0.0
    %126 = vmatpush1.msra.mxu0 0.0
    %127 = vmatprep.subr.mxu0 0.0
    %128 = vmatpush1.msra.mxu0 0.0
    %129 = vmatprep.subr.mxu0 0.0
    %130 = vmatpush1.msra.mxu0 0.0
    %131 = vmatprep.subr.mxu0 0.0
    %132 = vmatpush1.msra.mxu0 0.0
    %133 = vmatprep.subr.mxu0 0.0
    %134 = vmatpush1.msra.mxu0 0.0
    %135 = vmatprep.subr.mxu0 0.0
    %136 = vmatpush1.msra.mxu0 0.0
    %137 = vmatprep.subr.mxu0 0.0
    %138 = vmatpush1.msra.mxu0 0.0
    %139 = vmatprep.subr.mxu0 0.0
    %140 = vmatpush1.msra.mxu0 0.0
    %141 = vmatprep.subr.mxu0 0.0
    %142 = vmatpush1.msra.mxu0 0.0
    %143 = vmatprep.subr.mxu0 0.0
    %144 = vmatpush1.msra.mxu0 0.0
    %145 = vmatprep.subr.mxu0 0.0
    %146 = vmatpush1.msra.mxu0 0.0
    %147 = vmatprep.subr.mxu0 0.0
    %148 = vmatpush1.msra.mxu0 0.0
    %149 = vmatprep.subr.mxu0 0.0
    %150 = vmatpush1.msra.mxu0 0.0
    %151 = vmatprep.subr.mxu0 0.0
    %152 = vmatpush1.msra.mxu0 0.0
    %153 = vmatprep.subr.mxu0 0.0
    %154 = vmatpush1.msra.mxu0 0.0
    %155 = vmatprep.subr.mxu0 0.0
    %156 = vmatpush1.msra.mxu0 0.0
    %157 = vmatprep.subr.mxu0 0.0
    %158 = vmatpush1.msra.mxu0 0.0
    %159 = vmatprep.mubr.f32.mxu0 0.0
    %160 = vmatmul.mubr.f32.gmra.mrb[0].mxu0 %v80
    %v161 = vpop.f32.mrb[0].mxu0
    %v162 = vadd.f32 %v61, %v161
    %v163 = vpop.f32.mrb[0].mxu0
    %164 = vmatprep.mubr.f32.mxu0 0.0
    %165 = vmatmul.mubr.f32.gmra.mrb[0].mxu0 %v83
    %v166 = vpop.f32.mrb[0].mxu0
    %v167 = vadd.f32 %v66, %v166
    %v168 = vpop.f32.mrb[0].mxu0
    %169 = vmatprep.mubr.f32.mxu0 0.0
    %170 = vmatmul.mubr.f32.gmra.mrb[0].mxu0 %v86
    %v171 = vpop.f32.mrb[0].mxu0
    %v172 = vadd.f32 %v71, %v171
    %v173 = vpop.f32.mrb[0].mxu0
    %174 = vmatprep.mubr.f32.mxu0 0.0
    %175 = vmatmul.mubr.f32.gmra.mrb[0].mxu0 %v89
    %v176 = vpop.f32.mrb[0].mxu0
    %v177 = vadd.f32 %v76, %v176
    %v178 = vpop.f32.mrb[0].mxu0
    %179 = vdwg.mxu0
    %v180 = vmul.f32 %v162, 0.70710677
    %v181 = vmul.f32 %v167, 0.70710677
    %v182 = vmul.f32 %v172, 0.70710677
    %v183 = vmul.f32 %v177, 0.70710677
    %v184 = vand.u32 2147483647, %v180
    %v185 = vand.u32 2147483647, %v181
    %v186 = vand.u32 2147483647, %v182
    %v187 = vand.u32 2147483647, %v183
    %v188 = vmul.f32 %v184, 0.3275911
    %v189 = vmul.f32 %v185, 0.3275911
    %v190 = vmul.f32 %v186, 0.3275911
    %v191 = vmul.f32 %v187, 0.3275911
    %v192 = vadd.f32 %v188, 1.0
    %v193 = vadd.f32 %v189, 1.0
    %v194 = vadd.f32 %v190, 1.0
    %v195 = vadd.f32 %v191, 1.0
    %v196 = vrcp.pop %v192
    %v197 = vrcp.pop %v193
    %v198 = vrcp.pop %v194
    %v199 = vrcp.pop %v195
    %v200 = vmul.f32 %v192, %v196
    %v201 = vmul.f32 %v193, %v197
    %v202 = vmul.f32 %v194, %v198
    %v203 = vmul.f32 %v195, %v199
    %v204 = vsub.f32 2.0, %v200
    %v205 = vsub.f32 2.0, %v201
    %v206 = vsub.f32 2.0, %v202
    %v207 = vsub.f32 2.0, %v203
    %v208 = vmul.f32 %v196, %v204
    %v209 = vmul.f32 %v197, %v205
    %v210 = vmul.f32 %v198, %v206
    %v211 = vmul.f32 %v199, %v207
    %v212 = vmul.f32 %v208, 1.0614054
    %v213 = vmul.f32 %v209, 1.0614054
    %v214 = vmul.f32 %v210, 1.0614054
    %v215 = vmul.f32 %v211, 1.0614054
    %v216 = vadd.f32 %v212, -1.4531521
    %v217 = vadd.f32 %v213, -1.4531521
    %v218 = vadd.f32 %v214, -1.4531521
    %v219 = vadd.f32 %v215, -1.4531521
    %v220 = vmul.f32 %v216, %v208
    %v221 = vmul.f32 %v217, %v209
    %v222 = vmul.f32 %v218, %v210
    %v223 = vmul.f32 %v219, %v211
    %v224 = vadd.f32 %v220, 1.4214138
    %v225 = vadd.f32 %v221, 1.4214138
    %v226 = vadd.f32 %v222, 1.4214138
    %v227 = vadd.f32 %v223, 1.4214138
    %v228 = vmul.f32 %v224, %v208
    %v229 = vmul.f32 %v225, %v209
    %v230 = vmul.f32 %v226, %v210
    %v231 = vmul.f32 %v227, %v211
    %v232 = vadd.f32 %v228, -0.28449672
    %v233 = vadd.f32 %v229, -0.28449672
    %v234 = vadd.f32 %v230, -0.28449672
    %v235 = vadd.f32 %v231, -0.28449672
    %v236 = vmul.f32 %v232, %v208
    %v237 = vmul.f32 %v233, %v209
    %v238 = vmul.f32 %v234, %v210
    %v239 = vmul.f32 %v235, %v211
    %v240 = vadd.f32 %v236, 0.2548296
    %v241 = vadd.f32 %v237, 0.2548296
    %v242 = vadd.f32 %v238, 0.2548296
    %v243 = vadd.f32 %v239, 0.2548296
    %v244 = vmul.f32 %v240, %v208
    %v245 = vmul.f32 %v241, %v209
    %v246 = vmul.f32 %v242, %v210
    %v247 = vmul.f32 %v243, %v211
    %v248 = vsub.f32 0.0, %v184
    %v249 = vsub.f32 0.0, %v185
    %v250 = vsub.f32 0.0, %v186
    %v251 = vsub.f32 0.0, %v187
    %v252 = vmul.f32 %v248, %v184
    %v253 = vmul.f32 %v249, %v185
    %v254 = vmul.f32 %v250, %v186
    %v255 = vmul.f32 %v251, %v187
    %v256 = vmul.f32 %v252, 1.442695
    %v257 = vpow.pop %v256
    %v258 = vmul.f32 %v253, 1.442695
    %v259 = vpow.pop %v258
    %v260 = vmul.f32 %v254, 1.442695
    %v261 = vpow.pop %v260
    %v262 = vmul.f32 %v255, 1.442695
    %v263 = vpow.pop %v262
    %v264 = vmul.f32 %v244, %v257
    %v265 = vmul.f32 %v245, %v259
    %v266 = vmul.f32 %v246, %v261
    %v267 = vmul.f32 %v247, %v263
    %v268 = vsub.f32 1.0, %v264
    %v269 = vsub.f32 1.0, %v265
    %v270 = vsub.f32 1.0, %v266
    %v271 = vsub.f32 1.0, %v267
    %vm272 = vcmp.ge.f32.partialorder %v180, 0.0
    %vm273 = vcmp.ge.f32.partialorder %v181, 0.0
    %vm274 = vcmp.ge.f32.partialorder %v182, 0.0
    %vm275 = vcmp.ge.f32.partialorder %v183, 0.0
    %v276 = vsub.f32 0.0, %v268
    %v277 = vsub.f32 0.0, %v269
    %v278 = vsub.f32 0.0, %v270
    %v279 = vsub.f32 0.0, %v271
    %v280 = vsel %vm272, %v268, %v276
    %v281 = vsel %vm273, %v269, %v277
    %v282 = vsel %vm274, %v270, %v278
    %v283 = vsel %vm275, %v271, %v279
    %v284 = vmul.f32 %v162, 0.5
    %v285 = vmul.f32 %v167, 0.5
    %v286 = vmul.f32 %v172, 0.5
    %v287 = vmul.f32 %v177, 0.5
    %v288 = vadd.f32 %v280, 1.0
    %v289 = vadd.f32 %v281, 1.0
    %v290 = vadd.f32 %v282, 1.0
    %v291 = vadd.f32 %v283, 1.0
    %v292 = vmul.f32 %v284, %v288
    %v293 = vmul.f32 %v285, %v289
    %v294 = vmul.f32 %v286, %v290
    %v295 = vmul.f32 %v287, %v291
    %v296 = vld [vmem:[%s3] sm:$0xff]
    %v297 = vld [vmem:[%s3 + $0x8] sm:$0xff]
    %v298 = vld [vmem:[%s3 + $0x10] sm:$0xff]
    %v299 = vld [vmem:[%s3 + $0x18] sm:$0xff]
    %v300 = vld [vmem:[%s4] sm:$0xff]
    %v301 = vld [vmem:[%s4 + $0x8] sm:$0xff]
    %v302 = vld [vmem:[%s4 + $0x10] sm:$0xff]
    %v303 = vld [vmem:[%s4 + $0x18] sm:$0xff]
    %304 = vrot.lane.b32.xlu0 %v292, 1
    %v305 = vpop.permute.xlu0 %304
    %306 = vrot.lane.b32.xlu0 %v293, 1
    %v307 = vpop.permute.xlu0 %306
    %308 = vrot.lane.b32.xlu0 %v294, 1
    %v309 = vpop.permute.xlu0 %308
    %310 = vrot.lane.b32.xlu0 %v295, 1
    %v311 = vpop.permute.xlu0 %310
    %v312 = vsel %vm47, 1, 0
    %vm313 = vcmp.eq.s32.totalorder %v312, 1
    %v314 = vsel %vm313, %v305, 0.0
    %v315 = vsel %vm313, %v307, 0.0
    %v316 = vsel %vm313, %v309, 0.0
    %v317 = vsel %vm313, %v311, 0.0
    %318 = vrot.lane.b32.xlu0 %v292, 127
    %v319 = vpop.permute.xlu0 %318
    %320 = vrot.lane.b32.xlu0 %v293, 127
    %v321 = vpop.permute.xlu0 %320
    %322 = vrot.lane.b32.xlu0 %v294, 127
    %v323 = vpop.permute.xlu0 %322
    %324 = vrot.lane.b32.xlu0 %v295, 127
    %v325 = vpop.permute.xlu0 %324
    %v326 = vsel %vm48, 1, 0
    %vm327 = vcmp.eq.s32.totalorder %v326, 1
    %v328 = vsel %vm327, %v319, 0.0
    %v329 = vsel %vm327, %v321, 0.0
    %v330 = vsel %vm327, %v323, 0.0
    %v331 = vsel %vm327, %v325, 0.0
    %333 = vset.pattern.permute.xlu0 0
    %334 = vperm.xlu0 %333, %v300
    %v335 = vpop.permute.xlu0 %334
    %338 = vset.pattern.permute.xlu0 0
    %339 = vperm.xlu0 %338, %v301
    %v340 = vpop.permute.xlu0 %339
    %343 = vset.pattern.permute.xlu0 0
    %344 = vperm.xlu0 %343, %v302
    %v345 = vpop.permute.xlu0 %344
    %348 = vset.pattern.permute.xlu0 0
    %349 = vperm.xlu0 %348, %v303
    %v350 = vpop.permute.xlu0 %349
    %vm352 = vcmask 785408
    %v354 = vsel %vm352, %v296, 0
    %v357 = vsel %vm352, %v297, 0
    %v360 = vsel %vm352, %v298, 0
    %v363 = vsel %vm352, %v299, 0
    %365 = vmatprep.subr.mxu0 0.0
    %366 = vmatpush1.msra.mxu0 %v314
    %367 = vmatprep.subr.mxu0 0.0
    %368 = vmatpush1.msra.mxu0 %v315
    %369 = vmatprep.subr.mxu0 0.0
    %370 = vmatpush1.msra.mxu0 %v316
    %371 = vmatprep.subr.mxu0 0.0
    %372 = vmatpush1.msra.mxu0 %v317
    %373 = vmatprep.subr.mxu0 0.0
    %374 = vmatpush1.msra.mxu0 %v292
    %375 = vmatprep.subr.mxu0 0.0
    %376 = vmatpush1.msra.mxu0 %v293
    %377 = vmatprep.subr.mxu0 0.0
    %378 = vmatpush1.msra.mxu0 %v294
    %379 = vmatprep.subr.mxu0 0.0
    %380 = vmatpush1.msra.mxu0 %v295
    %381 = vmatprep.subr.mxu0 0.0
    %382 = vmatpush1.msra.mxu0 %v328
    %383 = vmatprep.subr.mxu0 0.0
    %384 = vmatpush1.msra.mxu0 %v329
    %385 = vmatprep.subr.mxu0 0.0
    %386 = vmatpush1.msra.mxu0 %v330
    %387 = vmatprep.subr.mxu0 0.0
    %388 = vmatpush1.msra.mxu0 %v331
    %389 = vmatprep.subr.mxu0 0.0
    %390 = vmatpush1.msra.mxu0 0.0
    %391 = vmatprep.subr.mxu0 0.0
    %392 = vmatpush1.msra.mxu0 0.0
    %393 = vmatprep.subr.mxu0 0.0
    %394 = vmatpush1.msra.mxu0 0.0
    %395 = vmatprep.subr.mxu0 0.0
    %396 = vmatpush1.msra.mxu0 0.0
    %397 = vmatprep.subr.mxu0 0.0
    %398 = vmatpush1.msra.mxu0 0.0
    %399 = vmatprep.subr.mxu0 0.0
    %400 = vmatpush1.msra.mxu0 0.0
    %401 = vmatprep.subr.mxu0 0.0
    %402 = vmatpush1.msra.mxu0 0.0
    %403 = vmatprep.subr.mxu0 0.0
    %404 = vmatpush1.msra.mxu0 0.0
    %405 = vmatprep.subr.mxu0 0.0
    %406 = vmatpush1.msra.mxu0 0.0
    %407 = vmatprep.subr.mxu0 0.0
    %408 = vmatpush1.msra.mxu0 0.0
    %409 = vmatprep.subr.mxu0 0.0
    %410 = vmatpush1.msra.mxu0 0.0
    %411 = vmatprep.subr.mxu0 0.0
    %412 = vmatpush1.msra.mxu0 0.0
    %413 = vmatprep.subr.mxu0 0.0
    %414 = vmatpush1.msra.mxu0 0.0
    %415 = vmatprep.subr.mxu0 0.0
    %416 = vmatpush1.msra.mxu0 0.0
    %417 = vmatprep.subr.mxu0 0.0
    %418 = vmatpush1.msra.mxu0 0.0
    %419 = vmatprep.subr.mxu0 0.0
    %420 = vmatpush1.msra.mxu0 0.0
    %421 = vmatprep.subr.mxu0 0.0
    %422 = vmatpush1.msra.mxu0 0.0
    %423 = vmatprep.subr.mxu0 0.0
    %424 = vmatpush1.msra.mxu0 0.0
    %425 = vmatprep.subr.mxu0 0.0
    %426 = vmatpush1.msra.mxu0 0.0
    %427 = vmatprep.subr.mxu0 0.0
    %428 = vmatpush1.msra.mxu0 0.0
    %429 = vmatprep.mubr.f32.mxu0 0.0
    %430 = vmatmul.mubr.f32.gmra.mrb[0].mxu0 %v354
    %v431 = vpop.f32.mrb[0].mxu0
    %v432 = vadd.f32 %v335, %v431
    %v433 = vpop.f32.mrb[0].mxu0
    %434 = vmatprep.mubr.f32.mxu0 0.0
    %435 = vmatmul.mubr.f32.gmra.mrb[0].mxu0 %v357
    %v436 = vpop.f32.mrb[0].mxu0
    %v437 = vadd.f32 %v340, %v436
    %v438 = vpop.f32.mrb[0].mxu0
    %439 = vmatprep.mubr.f32.mxu0 0.0
    %440 = vmatmul.mubr.f32.gmra.mrb[0].mxu0 %v360
    %v441 = vpop.f32.mrb[0].mxu0
    %v442 = vadd.f32 %v345, %v441
    %v443 = vpop.f32.mrb[0].mxu0
    %444 = vmatprep.mubr.f32.mxu0 0.0
    %445 = vmatmul.mubr.f32.gmra.mrb[0].mxu0 %v363
    %v446 = vpop.f32.mrb[0].mxu0
    %v447 = vadd.f32 %v350, %v446
    %v448 = vpop.f32.mrb[0].mxu0
    %449 = vdwg.mxu0
    %v450 = vld [vmem:[%s5] sm:$0xff]
    %v451 = vld [vmem:[%s5 + $0x8] sm:$0xff]
    %v452 = vld [vmem:[%s5 + $0x10] sm:$0xff]
    %v453 = vld [vmem:[%s5 + $0x18] sm:$0xff]
    %v454 = vld [vmem:[%s6] sm:$0xff]
    %v455 = vld [vmem:[%s6 + $0x8] sm:$0xff]
    %v456 = vld [vmem:[%s6 + $0x10] sm:$0xff]
    %v457 = vld [vmem:[%s6 + $0x18] sm:$0xff]
    %458 = vadd.xlane.f32.xlu0 %v432
    %v459 = vpop.xlane.xlu0 %458
    %460 = vadd.xlane.f32.xlu0 %v437
    %v461 = vpop.xlane.xlu0 %460
    %462 = vadd.xlane.f32.xlu0 %v442
    %v463 = vpop.xlane.xlu0 %462
    %464 = vadd.xlane.f32.xlu0 %v447
    %v465 = vpop.xlane.xlu0 %464
    %v466 = vmul.f32 %v432, %v432
    %v467 = vmul.f32 %v437, %v437
    %v468 = vmul.f32 %v442, %v442
    %v469 = vmul.f32 %v447, %v447
    %470 = vadd.xlane.f32.xlu0 %v466
    %v471 = vpop.xlane.xlu0 %470
    %472 = vadd.xlane.f32.xlu0 %v467
    %v473 = vpop.xlane.xlu0 %472
    %474 = vadd.xlane.f32.xlu0 %v468
    %v475 = vpop.xlane.xlu0 %474
    %476 = vadd.xlane.f32.xlu0 %v469
    %v477 = vpop.xlane.xlu0 %476
    %v478 = vmul.f32 %v459, 0.0078125
    %v479 = vmul.f32 %v461, 0.0078125
    %v480 = vmul.f32 %v463, 0.0078125
    %v481 = vmul.f32 %v465, 0.0078125
    %v482 = vmul.f32 %v471, 0.0078125
    %v483 = vmul.f32 %v473, 0.0078125
    %v484 = vmul.f32 %v475, 0.0078125
    %v485 = vmul.f32 %v477, 0.0078125
    %v486 = vmul.f32 %v478, %v478
    %v487 = vmul.f32 %v479, %v479
    %v488 = vmul.f32 %v480, %v480
    %v489 = vmul.f32 %v481, %v481
    %v490 = vsub.f32 %v482, %v486
    %v491 = vsub.f32 %v483, %v487
    %v492 = vsub.f32 %v484, %v488
    %v493 = vsub.f32 %v485, %v489
    %v494 = vsub.f32 %v432, %v478
    %v495 = vsub.f32 %v437, %v479
    %v496 = vsub.f32 %v442, %v480
    %v497 = vsub.f32 %v447, %v481
    %v498 = vadd.f32 %v490, 1e-05
    %v499 = vadd.f32 %v491, 1e-05
    %v500 = vadd.f32 %v492, 1e-05
    %v501 = vadd.f32 %v493, 1e-05
    %v502 = vrsqrt.pop %v498
    %v503 = vrsqrt.pop %v499
    %v504 = vrsqrt.pop %v500
    %v505 = vrsqrt.pop %v501
    %v506 = vmul.f32 %v494, %v502
    %v507 = vmul.f32 %v495, %v503
    %v508 = vmul.f32 %v496, %v504
    %v509 = vmul.f32 %v497, %v505
    %511 = vset.pattern.permute.xlu0 0
    %512 = vperm.xlu0 %511, %v450
    %v513 = vpop.permute.xlu0 %512
    %516 = vset.pattern.permute.xlu0 0
    %517 = vperm.xlu0 %516, %v451
    %v518 = vpop.permute.xlu0 %517
    %521 = vset.pattern.permute.xlu0 0
    %522 = vperm.xlu0 %521, %v452
    %v523 = vpop.permute.xlu0 %522
    %526 = vset.pattern.permute.xlu0 0
    %527 = vperm.xlu0 %526, %v453
    %v528 = vpop.permute.xlu0 %527
    %v530 = vmul.f32 %v513, %v506
    %v531 = vmul.f32 %v518, %v507
    %v532 = vmul.f32 %v523, %v508
    %v533 = vmul.f32 %v528, %v509
    %535 = vset.pattern.permute.xlu0 0
    %536 = vperm.xlu0 %535, %v454
    %v537 = vpop.permute.xlu0 %536
    %540 = vset.pattern.permute.xlu0 0
    %541 = vperm.xlu0 %540, %v455
    %v542 = vpop.permute.xlu0 %541
    %545 = vset.pattern.permute.xlu0 0
    %546 = vperm.xlu0 %545, %v456
    %v547 = vpop.permute.xlu0 %546
    %550 = vset.pattern.permute.xlu0 0
    %551 = vperm.xlu0 %550, %v457
    %v552 = vpop.permute.xlu0 %551
    %v554 = vadd.f32 %v530, %v537
    %v555 = vadd.f32 %v531, %v542
    %v556 = vadd.f32 %v532, %v547
    %v557 = vadd.f32 %v533, %v552
    %v558 = vmul.f32 %v554, 0.70710677
    %v559 = vmul.f32 %v555, 0.70710677
    %v560 = vmul.f32 %v556, 0.70710677
    %v561 = vmul.f32 %v557, 0.70710677
    %v562 = vand.u32 2147483647, %v558
    %v563 = vand.u32 2147483647, %v559
    %v564 = vand.u32 2147483647, %v560
    %v565 = vand.u32 2147483647, %v561
    %v566 = vmul.f32 %v562, 0.3275911
    %v567 = vmul.f32 %v563, 0.3275911
    %v568 = vmul.f32 %v564, 0.3275911
    %v569 = vmul.f32 %v565, 0.3275911
    %v570 = vadd.f32 %v566, 1.0
    %v571 = vadd.f32 %v567, 1.0
    %v572 = vadd.f32 %v568, 1.0
    %v573 = vadd.f32 %v569, 1.0
    %v574 = vrcp.pop %v570
    %v575 = vrcp.pop %v571
    %v576 = vrcp.pop %v572
    %v577 = vrcp.pop %v573
    %v578 = vmul.f32 %v570, %v574
    %v579 = vmul.f32 %v571, %v575
    %v580 = vmul.f32 %v572, %v576
    %v581 = vmul.f32 %v573, %v577
    %v582 = vsub.f32 2.0, %v578
    %v583 = vsub.f32 2.0, %v579
    %v584 = vsub.f32 2.0, %v580
    %v585 = vsub.f32 2.0, %v581
    %v586 = vmul.f32 %v574, %v582
    %v587 = vmul.f32 %v575, %v583
    %v588 = vmul.f32 %v576, %v584
    %v589 = vmul.f32 %v577, %v585
    %v590 = vmul.f32 %v586, 1.0614054
    %v591 = vmul.f32 %v587, 1.0614054
    %v592 = vmul.f32 %v588, 1.0614054
    %v593 = vmul.f32 %v589, 1.0614054
    %v594 = vadd.f32 %v590, -1.4531521
    %v595 = vadd.f32 %v591, -1.4531521
    %v596 = vadd.f32 %v592, -1.4531521
    %v597 = vadd.f32 %v593, -1.4531521
    %v598 = vmul.f32 %v594, %v586
    %v599 = vmul.f32 %v595, %v587
    %v600 = vmul.f32 %v596, %v588
    %v601 = vmul.f32 %v597, %v589
    %v602 = vadd.f32 %v598, 1.4214138
    %v603 = vadd.f32 %v599, 1.4214138
    %v604 = vadd.f32 %v600, 1.4214138
    %v605 = vadd.f32 %v601, 1.4214138
    %v606 = vmul.f32 %v602, %v586
    %v607 = vmul.f32 %v603, %v587
    %v608 = vmul.f32 %v604, %v588
    %v609 = vmul.f32 %v605, %v589
    %v610 = vadd.f32 %v606, -0.28449672
    %v611 = vadd.f32 %v607, -0.28449672
    %v612 = vadd.f32 %v608, -0.28449672
    %v613 = vadd.f32 %v609, -0.28449672
    %v614 = vmul.f32 %v610, %v586
    %v615 = vmul.f32 %v611, %v587
    %v616 = vmul.f32 %v612, %v588
    %v617 = vmul.f32 %v613, %v589
    %v618 = vadd.f32 %v614, 0.2548296
    %v619 = vadd.f32 %v615, 0.2548296
    %v620 = vadd.f32 %v616, 0.2548296
    %v621 = vadd.f32 %v617, 0.2548296
    %v622 = vmul.f32 %v618, %v586
    %v623 = vmul.f32 %v619, %v587
    %v624 = vmul.f32 %v620, %v588
    %v625 = vmul.f32 %v621, %v589
    %v626 = vsub.f32 0.0, %v562
    %v627 = vsub.f32 0.0, %v563
    %v628 = vsub.f32 0.0, %v564
    %v629 = vsub.f32 0.0, %v565
    %v630 = vmul.f32 %v626, %v562
    %v631 = vmul.f32 %v627, %v563
    %v632 = vmul.f32 %v628, %v564
    %v633 = vmul.f32 %v629, %v565
    %v634 = vmul.f32 %v630, 1.442695
    %v635 = vpow.pop %v634
    %v636 = vmul.f32 %v631, 1.442695
    %v637 = vpow.pop %v636
    %v638 = vmul.f32 %v632, 1.442695
    %v639 = vpow.pop %v638
    %v640 = vmul.f32 %v633, 1.442695
    %v641 = vpow.pop %v640
    %v642 = vmul.f32 %v622, %v635
    %v643 = vmul.f32 %v623, %v637
    %v644 = vmul.f32 %v624, %v639
    %v645 = vmul.f32 %v625, %v641
    %v646 = vsub.f32 1.0, %v642
    %v647 = vsub.f32 1.0, %v643
    %v648 = vsub.f32 1.0, %v644
    %v649 = vsub.f32 1.0, %v645
    %vm650 = vcmp.ge.f32.partialorder %v558, 0.0
    %vm651 = vcmp.ge.f32.partialorder %v559, 0.0
    %vm652 = vcmp.ge.f32.partialorder %v560, 0.0
    %vm653 = vcmp.ge.f32.partialorder %v561, 0.0
    %v654 = vsub.f32 0.0, %v646
    %v655 = vsub.f32 0.0, %v647
    %v656 = vsub.f32 0.0, %v648
    %v657 = vsub.f32 0.0, %v649
    %v658 = vsel %vm650, %v646, %v654
    %v659 = vsel %vm651, %v647, %v655
    %v660 = vsel %vm652, %v648, %v656
    %v661 = vsel %vm653, %v649, %v657
    %v662 = vmul.f32 %v554, 0.5
    %v663 = vmul.f32 %v555, 0.5
    %v664 = vmul.f32 %v556, 0.5
    %v665 = vmul.f32 %v557, 0.5
    %v666 = vadd.f32 %v658, 1.0
    %v667 = vadd.f32 %v659, 1.0
    %v668 = vadd.f32 %v660, 1.0
    %v669 = vadd.f32 %v661, 1.0
    %v670 = vmul.f32 %v662, %v666
    %v671 = vmul.f32 %v663, %v667
    %v672 = vmul.f32 %v664, %v668
    %v673 = vmul.f32 %v665, %v669
    %s674 = scalar_lea.vmem %s3, 32
    %v675 = vld [vmem:[%s674] sm:$0xff]
    %v676 = vld [vmem:[%s674 + $0x8] sm:$0xff]
    %v677 = vld [vmem:[%s674 + $0x10] sm:$0xff]
    %v678 = vld [vmem:[%s674 + $0x18] sm:$0xff]
    %s679 = scalar_lea.vmem %s4, 32
    %v680 = vld [vmem:[%s679] sm:$0xff]
    %v681 = vld [vmem:[%s679 + $0x8] sm:$0xff]
    %v682 = vld [vmem:[%s679 + $0x10] sm:$0xff]
    %v683 = vld [vmem:[%s679 + $0x18] sm:$0xff]
    %684 = vrot.lane.b32.xlu0 %v670, 1
    %v685 = vpop.permute.xlu0 %684
    %686 = vrot.lane.b32.xlu0 %v671, 1
    %v687 = vpop.permute.xlu0 %686
    %688 = vrot.lane.b32.xlu0 %v672, 1
    %v689 = vpop.permute.xlu0 %688
    %690 = vrot.lane.b32.xlu0 %v673, 1
    %v691 = vpop.permute.xlu0 %690
    %v692 = vsel %vm313, %v685, 0.0
    %v693 = vsel %vm313, %v687, 0.0
    %v694 = vsel %vm313, %v689, 0.0
    %v695 = vsel %vm313, %v691, 0.0
    %696 = vrot.lane.b32.xlu0 %v670, 127
    %v697 = vpop.permute.xlu0 %696
    %698 = vrot.lane.b32.xlu0 %v671, 127
    %v699 = vpop.permute.xlu0 %698
    %700 = vrot.lane.b32.xlu0 %v672, 127
    %v701 = vpop.permute.xlu0 %700
    %702 = vrot.lane.b32.xlu0 %v673, 127
    %v703 = vpop.permute.xlu0 %702
    %v704 = vsel %vm327, %v697, 0.0
    %v705 = vsel %vm327, %v699, 0.0
    %v706 = vsel %vm327, %v701, 0.0
    %v707 = vsel %vm327, %v703, 0.0
    %709 = vset.pattern.permute.xlu0 0
    %710 = vperm.xlu0 %709, %v680
    %v711 = vpop.permute.xlu0 %710
    %714 = vset.pattern.permute.xlu0 0
    %715 = vperm.xlu0 %714, %v681
    %v716 = vpop.permute.xlu0 %715
    %719 = vset.pattern.permute.xlu0 0
    %720 = vperm.xlu0 %719, %v682
    %v721 = vpop.permute.xlu0 %720
    %724 = vset.pattern.permute.xlu0 0
    %725 = vperm.xlu0 %724, %v683
    %v726 = vpop.permute.xlu0 %725
    %v729 = vsel %vm352, %v675, 0
    %v732 = vsel %vm352, %v676, 0
    %v735 = vsel %vm352, %v677, 0
    %v738 = vsel %vm352, %v678, 0
    %740 = vmatprep.subr.mxu0 0.0
    %741 = vmatpush1.msra.mxu0 %v692
    %742 = vmatprep.subr.mxu0 0.0
    %743 = vmatpush1.msra.mxu0 %v693
    %744 = vmatprep.subr.mxu0 0.0
    %745 = vmatpush1.msra.mxu0 %v694
    %746 = vmatprep.subr.mxu0 0.0
    %747 = vmatpush1.msra.mxu0 %v695
    %748 = vmatprep.subr.mxu0 0.0
    %749 = vmatpush1.msra.mxu0 %v670
    %750 = vmatprep.subr.mxu0 0.0
    %751 = vmatpush1.msra.mxu0 %v671
    %752 = vmatprep.subr.mxu0 0.0
    %753 = vmatpush1.msra.mxu0 %v672
    %754 = vmatprep.subr.mxu0 0.0
    %755 = vmatpush1.msra.mxu0 %v673
    %756 = vmatprep.subr.mxu0 0.0
    %757 = vmatpush1.msra.mxu0 %v704
    %758 = vmatprep.subr.mxu0 0.0
    %759 = vmatpush1.msra.mxu0 %v705
    %760 = vmatprep.subr.mxu0 0.0
    %761 = vmatpush1.msra.mxu0 %v706
    %762 = vmatprep.subr.mxu0 0.0
    %763 = vmatpush1.msra.mxu0 %v707
    %764 = vmatprep.subr.mxu0 0.0
    %765 = vmatpush1.msra.mxu0 0.0
    %766 = vmatprep.subr.mxu0 0.0
    %767 = vmatpush1.msra.mxu0 0.0
    %768 = vmatprep.subr.mxu0 0.0
    %769 = vmatpush1.msra.mxu0 0.0
    %770 = vmatprep.subr.mxu0 0.0
    %771 = vmatpush1.msra.mxu0 0.0
    %772 = vmatprep.subr.mxu0 0.0
    %773 = vmatpush1.msra.mxu0 0.0
    %774 = vmatprep.subr.mxu0 0.0
    %775 = vmatpush1.msra.mxu0 0.0
    %776 = vmatprep.subr.mxu0 0.0
    %777 = vmatpush1.msra.mxu0 0.0
    %778 = vmatprep.subr.mxu0 0.0
    %779 = vmatpush1.msra.mxu0 0.0
    %780 = vmatprep.subr.mxu0 0.0
    %781 = vmatpush1.msra.mxu0 0.0
    %782 = vmatprep.subr.mxu0 0.0
    %783 = vmatpush1.msra.mxu0 0.0
    %784 = vmatprep.subr.mxu0 0.0
    %785 = vmatpush1.msra.mxu0 0.0
    %786 = vmatprep.subr.mxu0 0.0
    %787 = vmatpush1.msra.mxu0 0.0
    %788 = vmatprep.subr.mxu0 0.0
    %789 = vmatpush1.msra.mxu0 0.0
    %790 = vmatprep.subr.mxu0 0.0
    %791 = vmatpush1.msra.mxu0 0.0
    %792 = vmatprep.subr.mxu0 0.0
    %793 = vmatpush1.msra.mxu0 0.0
    %794 = vmatprep.subr.mxu0 0.0
    %795 = vmatpush1.msra.mxu0 0.0
    %796 = vmatprep.subr.mxu0 0.0
    %797 = vmatpush1.msra.mxu0 0.0
    %798 = vmatprep.subr.mxu0 0.0
    %799 = vmatpush1.msra.mxu0 0.0
    %800 = vmatprep.subr.mxu0 0.0
    %801 = vmatpush1.msra.mxu0 0.0
    %802 = vmatprep.subr.mxu0 0.0
    %803 = vmatpush1.msra.mxu0 0.0
    %804 = vmatprep.mubr.f32.mxu0 0.0
    %805 = vmatmul.mubr.f32.gmra.mrb[0].mxu0 %v729
    %v806 = vpop.f32.mrb[0].mxu0
    %v807 = vadd.f32 %v711, %v806
    %v808 = vpop.f32.mrb[0].mxu0
    %809 = vmatprep.mubr.f32.mxu0 0.0
    %810 = vmatmul.mubr.f32.gmra.mrb[0].mxu0 %v732
    %v811 = vpop.f32.mrb[0].mxu0
    %v812 = vadd.f32 %v716, %v811
    %v813 = vpop.f32.mrb[0].mxu0
    %814 = vmatprep.mubr.f32.mxu0 0.0
    %815 = vmatmul.mubr.f32.gmra.mrb[0].mxu0 %v735
    %v816 = vpop.f32.mrb[0].mxu0
    %v817 = vadd.f32 %v721, %v816
    %v818 = vpop.f32.mrb[0].mxu0
    %819 = vmatprep.mubr.f32.mxu0 0.0
    %820 = vmatmul.mubr.f32.gmra.mrb[0].mxu0 %v738
    %v821 = vpop.f32.mrb[0].mxu0
    %v822 = vadd.f32 %v726, %v821
    %v823 = vpop.f32.mrb[0].mxu0
    %824 = vdwg.mxu0
    %s825 = scalar_lea.vmem %s5, 32
    %v826 = vld [vmem:[%s825] sm:$0xff]
    %v827 = vld [vmem:[%s825 + $0x8] sm:$0xff]
    %v828 = vld [vmem:[%s825 + $0x10] sm:$0xff]
    %v829 = vld [vmem:[%s825 + $0x18] sm:$0xff]
    %s830 = scalar_lea.vmem %s6, 32
    %v831 = vld [vmem:[%s830] sm:$0xff]
    %v832 = vld [vmem:[%s830 + $0x8] sm:$0xff]
    %v833 = vld [vmem:[%s830 + $0x10] sm:$0xff]
    %v834 = vld [vmem:[%s830 + $0x18] sm:$0xff]
    %835 = vadd.xlane.f32.xlu0 %v807
    %v836 = vpop.xlane.xlu0 %835
    %837 = vadd.xlane.f32.xlu0 %v812
    %v838 = vpop.xlane.xlu0 %837
    %839 = vadd.xlane.f32.xlu0 %v817
    %v840 = vpop.xlane.xlu0 %839
    %841 = vadd.xlane.f32.xlu0 %v822
    %v842 = vpop.xlane.xlu0 %841
    %v843 = vmul.f32 %v807, %v807
    %v844 = vmul.f32 %v812, %v812
    %v845 = vmul.f32 %v817, %v817
    %v846 = vmul.f32 %v822, %v822
    %847 = vadd.xlane.f32.xlu0 %v843
    %v848 = vpop.xlane.xlu0 %847
    %849 = vadd.xlane.f32.xlu0 %v844
    %v850 = vpop.xlane.xlu0 %849
    %851 = vadd.xlane.f32.xlu0 %v845
    %v852 = vpop.xlane.xlu0 %851
    %853 = vadd.xlane.f32.xlu0 %v846
    %v854 = vpop.xlane.xlu0 %853
    %v855 = vmul.f32 %v836, 0.0078125
    %v856 = vmul.f32 %v838, 0.0078125
    %v857 = vmul.f32 %v840, 0.0078125
    %v858 = vmul.f32 %v842, 0.0078125
    %v859 = vmul.f32 %v848, 0.0078125
    %v860 = vmul.f32 %v850, 0.0078125
    %v861 = vmul.f32 %v852, 0.0078125
    %v862 = vmul.f32 %v854, 0.0078125
    %v863 = vmul.f32 %v855, %v855
    %v864 = vmul.f32 %v856, %v856
    %v865 = vmul.f32 %v857, %v857
    %v866 = vmul.f32 %v858, %v858
    %v867 = vsub.f32 %v859, %v863
    %v868 = vsub.f32 %v860, %v864
    %v869 = vsub.f32 %v861, %v865
    %v870 = vsub.f32 %v862, %v866
    %v871 = vsub.f32 %v807, %v855
    %v872 = vsub.f32 %v812, %v856
    %v873 = vsub.f32 %v817, %v857
    %v874 = vsub.f32 %v822, %v858
    %v875 = vadd.f32 %v867, 1e-05
    %v876 = vadd.f32 %v868, 1e-05
    %v877 = vadd.f32 %v869, 1e-05
    %v878 = vadd.f32 %v870, 1e-05
    %v879 = vrsqrt.pop %v875
    %v880 = vrsqrt.pop %v876
    %v881 = vrsqrt.pop %v877
    %v882 = vrsqrt.pop %v878
    %v883 = vmul.f32 %v871, %v879
    %v884 = vmul.f32 %v872, %v880
    %v885 = vmul.f32 %v873, %v881
    %v886 = vmul.f32 %v874, %v882
    %888 = vset.pattern.permute.xlu0 0
    %889 = vperm.xlu0 %888, %v826
    %v890 = vpop.permute.xlu0 %889
    %893 = vset.pattern.permute.xlu0 0
    %894 = vperm.xlu0 %893, %v827
    %v895 = vpop.permute.xlu0 %894
    %898 = vset.pattern.permute.xlu0 0
    %899 = vperm.xlu0 %898, %v828
    %v900 = vpop.permute.xlu0 %899
    %903 = vset.pattern.permute.xlu0 0
    %904 = vperm.xlu0 %903, %v829
    %v905 = vpop.permute.xlu0 %904
    %v907 = vmul.f32 %v890, %v883
    %v908 = vmul.f32 %v895, %v884
    %v909 = vmul.f32 %v900, %v885
    %v910 = vmul.f32 %v905, %v886
    %912 = vset.pattern.permute.xlu0 0
    %913 = vperm.xlu0 %912, %v831
    %v914 = vpop.permute.xlu0 %913
    %917 = vset.pattern.permute.xlu0 0
    %918 = vperm.xlu0 %917, %v832
    %v919 = vpop.permute.xlu0 %918
    %922 = vset.pattern.permute.xlu0 0
    %923 = vperm.xlu0 %922, %v833
    %v924 = vpop.permute.xlu0 %923
    %927 = vset.pattern.permute.xlu0 0
    %928 = vperm.xlu0 %927, %v834
    %v929 = vpop.permute.xlu0 %928
    %v931 = vadd.f32 %v907, %v914
    %v932 = vadd.f32 %v908, %v919
    %v933 = vadd.f32 %v909, %v924
    %v934 = vadd.f32 %v910, %v929
    %v935 = vadd.f32 %v931, %v292
    %v936 = vadd.f32 %v932, %v293
    %v937 = vadd.f32 %v933, %v294
    %v938 = vadd.f32 %v934, %v295
    %v939 = vmul.f32 %v935, 0.70710677
    %v940 = vmul.f32 %v936, 0.70710677
    %v941 = vmul.f32 %v937, 0.70710677
    %v942 = vmul.f32 %v938, 0.70710677
    %v943 = vand.u32 2147483647, %v939
    %v944 = vand.u32 2147483647, %v940
    %v945 = vand.u32 2147483647, %v941
    %v946 = vand.u32 2147483647, %v942
    %v947 = vmul.f32 %v943, 0.3275911
    %v948 = vmul.f32 %v944, 0.3275911
    %v949 = vmul.f32 %v945, 0.3275911
    %v950 = vmul.f32 %v946, 0.3275911
    %v951 = vadd.f32 %v947, 1.0
    %v952 = vadd.f32 %v948, 1.0
    %v953 = vadd.f32 %v949, 1.0
    %v954 = vadd.f32 %v950, 1.0
    %v955 = vrcp.pop %v951
    %v956 = vrcp.pop %v952
    %v957 = vrcp.pop %v953
    %v958 = vrcp.pop %v954
    %v959 = vmul.f32 %v951, %v955
    %v960 = vmul.f32 %v952, %v956
    %v961 = vmul.f32 %v953, %v957
    %v962 = vmul.f32 %v954, %v958
    %v963 = vsub.f32 2.0, %v959
    %v964 = vsub.f32 2.0, %v960
    %v965 = vsub.f32 2.0, %v961
    %v966 = vsub.f32 2.0, %v962
    %v967 = vmul.f32 %v955, %v963
    %v968 = vmul.f32 %v956, %v964
    %v969 = vmul.f32 %v957, %v965
    %v970 = vmul.f32 %v958, %v966
    %v971 = vmul.f32 %v967, 1.0614054
    %v972 = vmul.f32 %v968, 1.0614054
    %v973 = vmul.f32 %v969, 1.0614054
    %v974 = vmul.f32 %v970, 1.0614054
    %v975 = vadd.f32 %v971, -1.4531521
    %v976 = vadd.f32 %v972, -1.4531521
    %v977 = vadd.f32 %v973, -1.4531521
    %v978 = vadd.f32 %v974, -1.4531521
    %v979 = vmul.f32 %v975, %v967
    %v980 = vmul.f32 %v976, %v968
    %v981 = vmul.f32 %v977, %v969
    %v982 = vmul.f32 %v978, %v970
    %v983 = vadd.f32 %v979, 1.4214138
    %v984 = vadd.f32 %v980, 1.4214138
    %v985 = vadd.f32 %v981, 1.4214138
    %v986 = vadd.f32 %v982, 1.4214138
    %v987 = vmul.f32 %v983, %v967
    %v988 = vmul.f32 %v984, %v968
    %v989 = vmul.f32 %v985, %v969
    %v990 = vmul.f32 %v986, %v970
    %v991 = vadd.f32 %v987, -0.28449672
    %v992 = vadd.f32 %v988, -0.28449672
    %v993 = vadd.f32 %v989, -0.28449672
    %v994 = vadd.f32 %v990, -0.28449672
    %v995 = vmul.f32 %v991, %v967
    %v996 = vmul.f32 %v992, %v968
    %v997 = vmul.f32 %v993, %v969
    %v998 = vmul.f32 %v994, %v970
    %v999 = vadd.f32 %v995, 0.2548296
    %v1000 = vadd.f32 %v996, 0.2548296
    %v1001 = vadd.f32 %v997, 0.2548296
    %v1002 = vadd.f32 %v998, 0.2548296
    %v1003 = vmul.f32 %v999, %v967
    %v1004 = vmul.f32 %v1000, %v968
    %v1005 = vmul.f32 %v1001, %v969
    %v1006 = vmul.f32 %v1002, %v970
    %v1007 = vsub.f32 0.0, %v943
    %v1008 = vsub.f32 0.0, %v944
    %v1009 = vsub.f32 0.0, %v945
    %v1010 = vsub.f32 0.0, %v946
    %v1011 = vmul.f32 %v1007, %v943
    %v1012 = vmul.f32 %v1008, %v944
    %v1013 = vmul.f32 %v1009, %v945
    %v1014 = vmul.f32 %v1010, %v946
    %v1015 = vmul.f32 %v1011, 1.442695
    %v1016 = vpow.pop %v1015
    %v1017 = vmul.f32 %v1012, 1.442695
    %v1018 = vpow.pop %v1017
    %v1019 = vmul.f32 %v1013, 1.442695
    %v1020 = vpow.pop %v1019
    %v1021 = vmul.f32 %v1014, 1.442695
    %v1022 = vpow.pop %v1021
    %v1023 = vmul.f32 %v1003, %v1016
    %v1024 = vmul.f32 %v1004, %v1018
    %v1025 = vmul.f32 %v1005, %v1020
    %v1026 = vmul.f32 %v1006, %v1022
    %v1027 = vsub.f32 1.0, %v1023
    %v1028 = vsub.f32 1.0, %v1024
    %v1029 = vsub.f32 1.0, %v1025
    %v1030 = vsub.f32 1.0, %v1026
    %vm1031 = vcmp.ge.f32.partialorder %v939, 0.0
    %vm1032 = vcmp.ge.f32.partialorder %v940, 0.0
    %vm1033 = vcmp.ge.f32.partialorder %v941, 0.0
    %vm1034 = vcmp.ge.f32.partialorder %v942, 0.0
    %v1035 = vsub.f32 0.0, %v1027
    %v1036 = vsub.f32 0.0, %v1028
    %v1037 = vsub.f32 0.0, %v1029
    %v1038 = vsub.f32 0.0, %v1030
    %v1039 = vsel %vm1031, %v1027, %v1035
    %v1040 = vsel %vm1032, %v1028, %v1036
    %v1041 = vsel %vm1033, %v1029, %v1037
    %v1042 = vsel %vm1034, %v1030, %v1038
    %v1043 = vmul.f32 %v935, 0.5
    %v1044 = vmul.f32 %v936, 0.5
    %v1045 = vmul.f32 %v937, 0.5
    %v1046 = vmul.f32 %v938, 0.5
    %v1047 = vadd.f32 %v1039, 1.0
    %v1048 = vadd.f32 %v1040, 1.0
    %v1049 = vadd.f32 %v1041, 1.0
    %v1050 = vadd.f32 %v1042, 1.0
    %v1051 = vmul.f32 %v1043, %v1047
    %v1052 = vmul.f32 %v1044, %v1048
    %v1053 = vmul.f32 %v1045, %v1049
    %v1054 = vmul.f32 %v1046, %v1050
    %s1055 = scalar_lea.vmem %s3, 64
    %v1056 = vld [vmem:[%s1055] sm:$0xff]
    %v1057 = vld [vmem:[%s1055 + $0x8] sm:$0xff]
    %v1058 = vld [vmem:[%s1055 + $0x10] sm:$0xff]
    %v1059 = vld [vmem:[%s1055 + $0x18] sm:$0xff]
    %s1060 = scalar_lea.vmem %s4, 64
    %v1061 = vld [vmem:[%s1060] sm:$0xff]
    %v1062 = vld [vmem:[%s1060 + $0x8] sm:$0xff]
    %v1063 = vld [vmem:[%s1060 + $0x10] sm:$0xff]
    %v1064 = vld [vmem:[%s1060 + $0x18] sm:$0xff]
    %1065 = vrot.lane.b32.xlu0 %v1051, 1
    %v1066 = vpop.permute.xlu0 %1065
    %1067 = vrot.lane.b32.xlu0 %v1052, 1
    %v1068 = vpop.permute.xlu0 %1067
    %1069 = vrot.lane.b32.xlu0 %v1053, 1
    %v1070 = vpop.permute.xlu0 %1069
    %1071 = vrot.lane.b32.xlu0 %v1054, 1
    %v1072 = vpop.permute.xlu0 %1071
    %v1073 = vsel %vm313, %v1066, 0.0
    %v1074 = vsel %vm313, %v1068, 0.0
    %v1075 = vsel %vm313, %v1070, 0.0
    %v1076 = vsel %vm313, %v1072, 0.0
    %1077 = vrot.lane.b32.xlu0 %v1051, 127
    %v1078 = vpop.permute.xlu0 %1077
    %1079 = vrot.lane.b32.xlu0 %v1052, 127
    %v1080 = vpop.permute.xlu0 %1079
    %1081 = vrot.lane.b32.xlu0 %v1053, 127
    %v1082 = vpop.permute.xlu0 %1081
    %1083 = vrot.lane.b32.xlu0 %v1054, 127
    %v1084 = vpop.permute.xlu0 %1083
    %v1085 = vsel %vm327, %v1078, 0.0
    %v1086 = vsel %vm327, %v1080, 0.0
    %v1087 = vsel %vm327, %v1082, 0.0
    %v1088 = vsel %vm327, %v1084, 0.0
    %1090 = vset.pattern.permute.xlu0 0
    %1091 = vperm.xlu0 %1090, %v1061
    %v1092 = vpop.permute.xlu0 %1091
    %1095 = vset.pattern.permute.xlu0 0
    %1096 = vperm.xlu0 %1095, %v1062
    %v1097 = vpop.permute.xlu0 %1096
    %1100 = vset.pattern.permute.xlu0 0
    %1101 = vperm.xlu0 %1100, %v1063
    %v1102 = vpop.permute.xlu0 %1101
    %1105 = vset.pattern.permute.xlu0 0
    %1106 = vperm.xlu0 %1105, %v1064
    %v1107 = vpop.permute.xlu0 %1106
    %v1110 = vsel %vm352, %v1056, 0
    %v1113 = vsel %vm352, %v1057, 0
    %v1116 = vsel %vm352, %v1058, 0
    %v1119 = vsel %vm352, %v1059, 0
    %1121 = vmatprep.subr.mxu0 0.0
    %1122 = vmatpush1.msra.mxu0 %v1073
    %1123 = vmatprep.subr.mxu0 0.0
    %1124 = vmatpush1.msra.mxu0 %v1074
    %1125 = vmatprep.subr.mxu0 0.0
    %1126 = vmatpush1.msra.mxu0 %v1075
    %1127 = vmatprep.subr.mxu0 0.0
    %1128 = vmatpush1.msra.mxu0 %v1076
    %1129 = vmatprep.subr.mxu0 0.0
    %1130 = vmatpush1.msra.mxu0 %v1051
    %1131 = vmatprep.subr.mxu0 0.0
    %1132 = vmatpush1.msra.mxu0 %v1052
    %1133 = vmatprep.subr.mxu0 0.0
    %1134 = vmatpush1.msra.mxu0 %v1053
    %1135 = vmatprep.subr.mxu0 0.0
    %1136 = vmatpush1.msra.mxu0 %v1054
    %1137 = vmatprep.subr.mxu0 0.0
    %1138 = vmatpush1.msra.mxu0 %v1085
    %1139 = vmatprep.subr.mxu0 0.0
    %1140 = vmatpush1.msra.mxu0 %v1086
    %1141 = vmatprep.subr.mxu0 0.0
    %1142 = vmatpush1.msra.mxu0 %v1087
    %1143 = vmatprep.subr.mxu0 0.0
    %1144 = vmatpush1.msra.mxu0 %v1088
    %1145 = vmatprep.subr.mxu0 0.0
    %1146 = vmatpush1.msra.mxu0 0.0
    %1147 = vmatprep.subr.mxu0 0.0
    %1148 = vmatpush1.msra.mxu0 0.0
    %1149 = vmatprep.subr.mxu0 0.0
    %1150 = vmatpush1.msra.mxu0 0.0
    %1151 = vmatprep.subr.mxu0 0.0
    %1152 = vmatpush1.msra.mxu0 0.0
    %1153 = vmatprep.subr.mxu0 0.0
    %1154 = vmatpush1.msra.mxu0 0.0
    %1155 = vmatprep.subr.mxu0 0.0
    %1156 = vmatpush1.msra.mxu0 0.0
    %1157 = vmatprep.subr.mxu0 0.0
    %1158 = vmatpush1.msra.mxu0 0.0
    %1159 = vmatprep.subr.mxu0 0.0
    %1160 = vmatpush1.msra.mxu0 0.0
    %1161 = vmatprep.subr.mxu0 0.0
    %1162 = vmatpush1.msra.mxu0 0.0
    %1163 = vmatprep.subr.mxu0 0.0
    %1164 = vmatpush1.msra.mxu0 0.0
    %1165 = vmatprep.subr.mxu0 0.0
    %1166 = vmatpush1.msra.mxu0 0.0
    %1167 = vmatprep.subr.mxu0 0.0
    %1168 = vmatpush1.msra.mxu0 0.0
    %1169 = vmatprep.subr.mxu0 0.0
    %1170 = vmatpush1.msra.mxu0 0.0
    %1171 = vmatprep.subr.mxu0 0.0
    %1172 = vmatpush1.msra.mxu0 0.0
    %1173 = vmatprep.subr.mxu0 0.0
    %1174 = vmatpush1.msra.mxu0 0.0
    %1175 = vmatprep.subr.mxu0 0.0
    %1176 = vmatpush1.msra.mxu0 0.0
    %1177 = vmatprep.subr.mxu0 0.0
    %1178 = vmatpush1.msra.mxu0 0.0
    %1179 = vmatprep.subr.mxu0 0.0
    %1180 = vmatpush1.msra.mxu0 0.0
    %1181 = vmatprep.subr.mxu0 0.0
    %1182 = vmatpush1.msra.mxu0 0.0
    %1183 = vmatprep.subr.mxu0 0.0
    %1184 = vmatpush1.msra.mxu0 0.0
    %1185 = vmatprep.mubr.f32.mxu0 0.0
    %1186 = vmatmul.mubr.f32.gmra.mrb[0].mxu0 %v1110
    %v1187 = vpop.f32.mrb[0].mxu0
    %v1188 = vadd.f32 %v1092, %v1187
    %v1189 = vpop.f32.mrb[0].mxu0
    %1190 = vmatprep.mubr.f32.mxu0 0.0
    %1191 = vmatmul.mubr.f32.gmra.mrb[0].mxu0 %v1113
    %v1192 = vpop.f32.mrb[0].mxu0
    %v1193 = vadd.f32 %v1097, %v1192
    %v1194 = vpop.f32.mrb[0].mxu0
    %1195 = vmatprep.mubr.f32.mxu0 0.0
    %1196 = vmatmul.mubr.f32.gmra.mrb[0].mxu0 %v1116
    %v1197 = vpop.f32.mrb[0].mxu0
    %v1198 = vadd.f32 %v1102, %v1197
    %v1199 = vpop.f32.mrb[0].mxu0
    %1200 = vmatprep.mubr.f32.mxu0 0.0
    %1201 = vmatmul.mubr.f32.gmra.mrb[0].mxu0 %v1119
    %v1202 = vpop.f32.mrb[0].mxu0
    %v1203 = vadd.f32 %v1107, %v1202
    %v1204 = vpop.f32.mrb[0].mxu0
    %1205 = vdwg.mxu0
    %s1206 = scalar_lea.vmem %s5, 64
    %v1207 = vld [vmem:[%s1206] sm:$0xff]
    %v1208 = vld [vmem:[%s1206 + $0x8] sm:$0xff]
    %v1209 = vld [vmem:[%s1206 + $0x10] sm:$0xff]
    %v1210 = vld [vmem:[%s1206 + $0x18] sm:$0xff]
    %s1211 = scalar_lea.vmem %s6, 64
    %v1212 = vld [vmem:[%s1211] sm:$0xff]
    %v1213 = vld [vmem:[%s1211 + $0x8] sm:$0xff]
    %v1214 = vld [vmem:[%s1211 + $0x10] sm:$0xff]
    %v1215 = vld [vmem:[%s1211 + $0x18] sm:$0xff]
    %1216 = vadd.xlane.f32.xlu0 %v1188
    %v1217 = vpop.xlane.xlu0 %1216
    %1218 = vadd.xlane.f32.xlu0 %v1193
    %v1219 = vpop.xlane.xlu0 %1218
    %1220 = vadd.xlane.f32.xlu0 %v1198
    %v1221 = vpop.xlane.xlu0 %1220
    %1222 = vadd.xlane.f32.xlu0 %v1203
    %v1223 = vpop.xlane.xlu0 %1222
    %v1224 = vmul.f32 %v1188, %v1188
    %v1225 = vmul.f32 %v1193, %v1193
    %v1226 = vmul.f32 %v1198, %v1198
    %v1227 = vmul.f32 %v1203, %v1203
    %1228 = vadd.xlane.f32.xlu0 %v1224
    %v1229 = vpop.xlane.xlu0 %1228
    %1230 = vadd.xlane.f32.xlu0 %v1225
    %v1231 = vpop.xlane.xlu0 %1230
    %1232 = vadd.xlane.f32.xlu0 %v1226
    %v1233 = vpop.xlane.xlu0 %1232
    %1234 = vadd.xlane.f32.xlu0 %v1227
    %v1235 = vpop.xlane.xlu0 %1234
    %v1236 = vmul.f32 %v1217, 0.0078125
    %v1237 = vmul.f32 %v1219, 0.0078125
    %v1238 = vmul.f32 %v1221, 0.0078125
    %v1239 = vmul.f32 %v1223, 0.0078125
    %v1240 = vmul.f32 %v1229, 0.0078125
    %v1241 = vmul.f32 %v1231, 0.0078125
    %v1242 = vmul.f32 %v1233, 0.0078125
    %v1243 = vmul.f32 %v1235, 0.0078125
    %v1244 = vmul.f32 %v1236, %v1236
    %v1245 = vmul.f32 %v1237, %v1237
    %v1246 = vmul.f32 %v1238, %v1238
    %v1247 = vmul.f32 %v1239, %v1239
    %v1248 = vsub.f32 %v1240, %v1244
    %v1249 = vsub.f32 %v1241, %v1245
    %v1250 = vsub.f32 %v1242, %v1246
    %v1251 = vsub.f32 %v1243, %v1247
    %v1252 = vsub.f32 %v1188, %v1236
    %v1253 = vsub.f32 %v1193, %v1237
    %v1254 = vsub.f32 %v1198, %v1238
    %v1255 = vsub.f32 %v1203, %v1239
    %v1256 = vadd.f32 %v1248, 1e-05
    %v1257 = vadd.f32 %v1249, 1e-05
    %v1258 = vadd.f32 %v1250, 1e-05
    %v1259 = vadd.f32 %v1251, 1e-05
    %v1260 = vrsqrt.pop %v1256
    %v1261 = vrsqrt.pop %v1257
    %v1262 = vrsqrt.pop %v1258
    %v1263 = vrsqrt.pop %v1259
    %v1264 = vmul.f32 %v1252, %v1260
    %v1265 = vmul.f32 %v1253, %v1261
    %v1266 = vmul.f32 %v1254, %v1262
    %v1267 = vmul.f32 %v1255, %v1263
    %1269 = vset.pattern.permute.xlu0 0
    %1270 = vperm.xlu0 %1269, %v1207
    %v1271 = vpop.permute.xlu0 %1270
    %1274 = vset.pattern.permute.xlu0 0
    %1275 = vperm.xlu0 %1274, %v1208
    %v1276 = vpop.permute.xlu0 %1275
    %1279 = vset.pattern.permute.xlu0 0
    %1280 = vperm.xlu0 %1279, %v1209
    %v1281 = vpop.permute.xlu0 %1280
    %1284 = vset.pattern.permute.xlu0 0
    %1285 = vperm.xlu0 %1284, %v1210
    %v1286 = vpop.permute.xlu0 %1285
    %v1288 = vmul.f32 %v1271, %v1264
    %v1289 = vmul.f32 %v1276, %v1265
    %v1290 = vmul.f32 %v1281, %v1266
    %v1291 = vmul.f32 %v1286, %v1267
    %1293 = vset.pattern.permute.xlu0 0
    %1294 = vperm.xlu0 %1293, %v1212
    %v1295 = vpop.permute.xlu0 %1294
    %1298 = vset.pattern.permute.xlu0 0
    %1299 = vperm.xlu0 %1298, %v1213
    %v1300 = vpop.permute.xlu0 %1299
    %1303 = vset.pattern.permute.xlu0 0
    %1304 = vperm.xlu0 %1303, %v1214
    %v1305 = vpop.permute.xlu0 %1304
    %1308 = vset.pattern.permute.xlu0 0
    %1309 = vperm.xlu0 %1308, %v1215
    %v1310 = vpop.permute.xlu0 %1309
    %v1312 = vadd.f32 %v1288, %v1295
    %v1313 = vadd.f32 %v1289, %v1300
    %v1314 = vadd.f32 %v1290, %v1305
    %v1315 = vadd.f32 %v1291, %v1310
    %v1316 = vmul.f32 %v1312, 0.70710677
    %v1317 = vmul.f32 %v1313, 0.70710677
    %v1318 = vmul.f32 %v1314, 0.70710677
    %v1319 = vmul.f32 %v1315, 0.70710677
    %v1320 = vand.u32 2147483647, %v1316
    %v1321 = vand.u32 2147483647, %v1317
    %v1322 = vand.u32 2147483647, %v1318
    %v1323 = vand.u32 2147483647, %v1319
    %v1324 = vmul.f32 %v1320, 0.3275911
    %v1325 = vmul.f32 %v1321, 0.3275911
    %v1326 = vmul.f32 %v1322, 0.3275911
    %v1327 = vmul.f32 %v1323, 0.3275911
    %v1328 = vadd.f32 %v1324, 1.0
    %v1329 = vadd.f32 %v1325, 1.0
    %v1330 = vadd.f32 %v1326, 1.0
    %v1331 = vadd.f32 %v1327, 1.0
    %v1332 = vrcp.pop %v1328
    %v1333 = vrcp.pop %v1329
    %v1334 = vrcp.pop %v1330
    %v1335 = vrcp.pop %v1331
    %v1336 = vmul.f32 %v1328, %v1332
    %v1337 = vmul.f32 %v1329, %v1333
    %v1338 = vmul.f32 %v1330, %v1334
    %v1339 = vmul.f32 %v1331, %v1335
    %v1340 = vsub.f32 2.0, %v1336
    %v1341 = vsub.f32 2.0, %v1337
    %v1342 = vsub.f32 2.0, %v1338
    %v1343 = vsub.f32 2.0, %v1339
    %v1344 = vmul.f32 %v1332, %v1340
    %v1345 = vmul.f32 %v1333, %v1341
    %v1346 = vmul.f32 %v1334, %v1342
    %v1347 = vmul.f32 %v1335, %v1343
    %v1348 = vmul.f32 %v1344, 1.0614054
    %v1349 = vmul.f32 %v1345, 1.0614054
    %v1350 = vmul.f32 %v1346, 1.0614054
    %v1351 = vmul.f32 %v1347, 1.0614054
    %v1352 = vadd.f32 %v1348, -1.4531521
    %v1353 = vadd.f32 %v1349, -1.4531521
    %v1354 = vadd.f32 %v1350, -1.4531521
    %v1355 = vadd.f32 %v1351, -1.4531521
    %v1356 = vmul.f32 %v1352, %v1344
    %v1357 = vmul.f32 %v1353, %v1345
    %v1358 = vmul.f32 %v1354, %v1346
    %v1359 = vmul.f32 %v1355, %v1347
    %v1360 = vadd.f32 %v1356, 1.4214138
    %v1361 = vadd.f32 %v1357, 1.4214138
    %v1362 = vadd.f32 %v1358, 1.4214138
    %v1363 = vadd.f32 %v1359, 1.4214138
    %v1364 = vmul.f32 %v1360, %v1344
    %v1365 = vmul.f32 %v1361, %v1345
    %v1366 = vmul.f32 %v1362, %v1346
    %v1367 = vmul.f32 %v1363, %v1347
    %v1368 = vadd.f32 %v1364, -0.28449672
    %v1369 = vadd.f32 %v1365, -0.28449672
    %v1370 = vadd.f32 %v1366, -0.28449672
    %v1371 = vadd.f32 %v1367, -0.28449672
    %v1372 = vmul.f32 %v1368, %v1344
    %v1373 = vmul.f32 %v1369, %v1345
    %v1374 = vmul.f32 %v1370, %v1346
    %v1375 = vmul.f32 %v1371, %v1347
    %v1376 = vadd.f32 %v1372, 0.2548296
    %v1377 = vadd.f32 %v1373, 0.2548296
    %v1378 = vadd.f32 %v1374, 0.2548296
    %v1379 = vadd.f32 %v1375, 0.2548296
    %v1380 = vmul.f32 %v1376, %v1344
    %v1381 = vmul.f32 %v1377, %v1345
    %v1382 = vmul.f32 %v1378, %v1346
    %v1383 = vmul.f32 %v1379, %v1347
    %v1384 = vsub.f32 0.0, %v1320
    %v1385 = vsub.f32 0.0, %v1321
    %v1386 = vsub.f32 0.0, %v1322
    %v1387 = vsub.f32 0.0, %v1323
    %v1388 = vmul.f32 %v1384, %v1320
    %v1389 = vmul.f32 %v1385, %v1321
    %v1390 = vmul.f32 %v1386, %v1322
    %v1391 = vmul.f32 %v1387, %v1323
    %v1392 = vmul.f32 %v1388, 1.442695
    %v1393 = vpow.pop %v1392
    %v1394 = vmul.f32 %v1389, 1.442695
    %v1395 = vpow.pop %v1394
    %v1396 = vmul.f32 %v1390, 1.442695
    %v1397 = vpow.pop %v1396
    %v1398 = vmul.f32 %v1391, 1.442695
    %v1399 = vpow.pop %v1398
    %v1400 = vmul.f32 %v1380, %v1393
    %v1401 = vmul.f32 %v1381, %v1395
    %v1402 = vmul.f32 %v1382, %v1397
    %v1403 = vmul.f32 %v1383, %v1399
    %v1404 = vsub.f32 1.0, %v1400
    %v1405 = vsub.f32 1.0, %v1401
    %v1406 = vsub.f32 1.0, %v1402
    %v1407 = vsub.f32 1.0, %v1403
    %vm1408 = vcmp.ge.f32.partialorder %v1316, 0.0
    %vm1409 = vcmp.ge.f32.partialorder %v1317, 0.0
    %vm1410 = vcmp.ge.f32.partialorder %v1318, 0.0
    %vm1411 = vcmp.ge.f32.partialorder %v1319, 0.0
    %v1412 = vsub.f32 0.0, %v1404
    %v1413 = vsub.f32 0.0, %v1405
    %v1414 = vsub.f32 0.0, %v1406
    %v1415 = vsub.f32 0.0, %v1407
    %v1416 = vsel %vm1408, %v1404, %v1412
    %v1417 = vsel %vm1409, %v1405, %v1413
    %v1418 = vsel %vm1410, %v1406, %v1414
    %v1419 = vsel %vm1411, %v1407, %v1415
    %v1420 = vmul.f32 %v1312, 0.5
    %v1421 = vmul.f32 %v1313, 0.5
    %v1422 = vmul.f32 %v1314, 0.5
    %v1423 = vmul.f32 %v1315, 0.5
    %v1424 = vadd.f32 %v1416, 1.0
    %v1425 = vadd.f32 %v1417, 1.0
    %v1426 = vadd.f32 %v1418, 1.0
    %v1427 = vadd.f32 %v1419, 1.0
    %v1428 = vmul.f32 %v1420, %v1424
    %v1429 = vmul.f32 %v1421, %v1425
    %v1430 = vmul.f32 %v1422, %v1426
    %v1431 = vmul.f32 %v1423, %v1427
    %s1432 = scalar_lea.vmem %s3, 96
    %v1433 = vld [vmem:[%s1432] sm:$0xff]
    %v1434 = vld [vmem:[%s1432 + $0x8] sm:$0xff]
    %v1435 = vld [vmem:[%s1432 + $0x10] sm:$0xff]
    %v1436 = vld [vmem:[%s1432 + $0x18] sm:$0xff]
    %s1437 = scalar_lea.vmem %s4, 96
    %v1438 = vld [vmem:[%s1437] sm:$0xff]
    %v1439 = vld [vmem:[%s1437 + $0x8] sm:$0xff]
    %v1440 = vld [vmem:[%s1437 + $0x10] sm:$0xff]
    %v1441 = vld [vmem:[%s1437 + $0x18] sm:$0xff]
    %1442 = vrot.lane.b32.xlu0 %v1428, 1
    %v1443 = vpop.permute.xlu0 %1442
    %1444 = vrot.lane.b32.xlu0 %v1429, 1
    %v1445 = vpop.permute.xlu0 %1444
    %1446 = vrot.lane.b32.xlu0 %v1430, 1
    %v1447 = vpop.permute.xlu0 %1446
    %1448 = vrot.lane.b32.xlu0 %v1431, 1
    %v1449 = vpop.permute.xlu0 %1448
    %v1450 = vsel %vm313, %v1443, 0.0
    %v1451 = vsel %vm313, %v1445, 0.0
    %v1452 = vsel %vm313, %v1447, 0.0
    %v1453 = vsel %vm313, %v1449, 0.0
    %1454 = vrot.lane.b32.xlu0 %v1428, 127
    %v1455 = vpop.permute.xlu0 %1454
    %1456 = vrot.lane.b32.xlu0 %v1429, 127
    %v1457 = vpop.permute.xlu0 %1456
    %1458 = vrot.lane.b32.xlu0 %v1430, 127
    %v1459 = vpop.permute.xlu0 %1458
    %1460 = vrot.lane.b32.xlu0 %v1431, 127
    %v1461 = vpop.permute.xlu0 %1460
    %v1462 = vsel %vm327, %v1455, 0.0
    %v1463 = vsel %vm327, %v1457, 0.0
    %v1464 = vsel %vm327, %v1459, 0.0
    %v1465 = vsel %vm327, %v1461, 0.0
    %1467 = vset.pattern.permute.xlu0 0
    %1468 = vperm.xlu0 %1467, %v1438
    %v1469 = vpop.permute.xlu0 %1468
    %1472 = vset.pattern.permute.xlu0 0
    %1473 = vperm.xlu0 %1472, %v1439
    %v1474 = vpop.permute.xlu0 %1473
    %1477 = vset.pattern.permute.xlu0 0
    %1478 = vperm.xlu0 %1477, %v1440
    %v1479 = vpop.permute.xlu0 %1478
    %1482 = vset.pattern.permute.xlu0 0
    %1483 = vperm.xlu0 %1482, %v1441
    %v1484 = vpop.permute.xlu0 %1483
    %v1487 = vsel %vm352, %v1433, 0
    %v1490 = vsel %vm352, %v1434, 0
    %v1493 = vsel %vm352, %v1435, 0
    %v1496 = vsel %vm352, %v1436, 0
    %1498 = vmatprep.subr.mxu0 0.0
    %1499 = vmatpush1.msra.mxu0 %v1450
    %1500 = vmatprep.subr.mxu0 0.0
    %1501 = vmatpush1.msra.mxu0 %v1451
    %1502 = vmatprep.subr.mxu0 0.0
    %1503 = vmatpush1.msra.mxu0 %v1452
    %1504 = vmatprep.subr.mxu0 0.0
    %1505 = vmatpush1.msra.mxu0 %v1453
    %1506 = vmatprep.subr.mxu0 0.0
    %1507 = vmatpush1.msra.mxu0 %v1428
    %1508 = vmatprep.subr.mxu0 0.0
    %1509 = vmatpush1.msra.mxu0 %v1429
    %1510 = vmatprep.subr.mxu0 0.0
    %1511 = vmatpush1.msra.mxu0 %v1430
    %1512 = vmatprep.subr.mxu0 0.0
    %1513 = vmatpush1.msra.mxu0 %v1431
    %1514 = vmatprep.subr.mxu0 0.0
    %1515 = vmatpush1.msra.mxu0 %v1462
    %1516 = vmatprep.subr.mxu0 0.0
    %1517 = vmatpush1.msra.mxu0 %v1463
    %1518 = vmatprep.subr.mxu0 0.0
    %1519 = vmatpush1.msra.mxu0 %v1464
    %1520 = vmatprep.subr.mxu0 0.0
    %1521 = vmatpush1.msra.mxu0 %v1465
    %1522 = vmatprep.subr.mxu0 0.0
    %1523 = vmatpush1.msra.mxu0 0.0
    %1524 = vmatprep.subr.mxu0 0.0
    %1525 = vmatpush1.msra.mxu0 0.0
    %1526 = vmatprep.subr.mxu0 0.0
    %1527 = vmatpush1.msra.mxu0 0.0
    %1528 = vmatprep.subr.mxu0 0.0
    %1529 = vmatpush1.msra.mxu0 0.0
    %1530 = vmatprep.subr.mxu0 0.0
    %1531 = vmatpush1.msra.mxu0 0.0
    %1532 = vmatprep.subr.mxu0 0.0
    %1533 = vmatpush1.msra.mxu0 0.0
    %1534 = vmatprep.subr.mxu0 0.0
    %1535 = vmatpush1.msra.mxu0 0.0
    %1536 = vmatprep.subr.mxu0 0.0
    %1537 = vmatpush1.msra.mxu0 0.0
    %1538 = vmatprep.subr.mxu0 0.0
    %1539 = vmatpush1.msra.mxu0 0.0
    %1540 = vmatprep.subr.mxu0 0.0
    %1541 = vmatpush1.msra.mxu0 0.0
    %1542 = vmatprep.subr.mxu0 0.0
    %1543 = vmatpush1.msra.mxu0 0.0
    %1544 = vmatprep.subr.mxu0 0.0
    %1545 = vmatpush1.msra.mxu0 0.0
    %1546 = vmatprep.subr.mxu0 0.0
    %1547 = vmatpush1.msra.mxu0 0.0
    %1548 = vmatprep.subr.mxu0 0.0
    %1549 = vmatpush1.msra.mxu0 0.0
    %1550 = vmatprep.subr.mxu0 0.0
    %1551 = vmatpush1.msra.mxu0 0.0
    %1552 = vmatprep.subr.mxu0 0.0
    %1553 = vmatpush1.msra.mxu0 0.0
    %1554 = vmatprep.subr.mxu0 0.0
    %1555 = vmatpush1.msra.mxu0 0.0
    %1556 = vmatprep.subr.mxu0 0.0
    %1557 = vmatpush1.msra.mxu0 0.0
    %1558 = vmatprep.subr.mxu0 0.0
    %1559 = vmatpush1.msra.mxu0 0.0
    %1560 = vmatprep.subr.mxu0 0.0
    %1561 = vmatpush1.msra.mxu0 0.0
    %1562 = vmatprep.mubr.f32.mxu0 0.0
    %1563 = vmatmul.mubr.f32.gmra.mrb[0].mxu0 %v1487
    %v1564 = vpop.f32.mrb[0].mxu0
    %v1565 = vadd.f32 %v1469, %v1564
    %v1566 = vpop.f32.mrb[0].mxu0
    %1567 = vmatprep.mubr.f32.mxu0 0.0
    %1568 = vmatmul.mubr.f32.gmra.mrb[0].mxu0 %v1490
    %v1569 = vpop.f32.mrb[0].mxu0
    %v1570 = vadd.f32 %v1474, %v1569
    %v1571 = vpop.f32.mrb[0].mxu0
    %1572 = vmatprep.mubr.f32.mxu0 0.0
    %1573 = vmatmul.mubr.f32.gmra.mrb[0].mxu0 %v1493
    %v1574 = vpop.f32.mrb[0].mxu0
    %v1575 = vadd.f32 %v1479, %v1574
    %v1576 = vpop.f32.mrb[0].mxu0
    %1577 = vmatprep.mubr.f32.mxu0 0.0
    %1578 = vmatmul.mubr.f32.gmra.mrb[0].mxu0 %v1496
    %v1579 = vpop.f32.mrb[0].mxu0
    %v1580 = vadd.f32 %v1484, %v1579
    %v1581 = vpop.f32.mrb[0].mxu0
    %1582 = vdwg.mxu0
    %s1583 = scalar_lea.vmem %s5, 96
    %v1584 = vld [vmem:[%s1583] sm:$0xff]
    %v1585 = vld [vmem:[%s1583 + $0x8] sm:$0xff]
    %v1586 = vld [vmem:[%s1583 + $0x10] sm:$0xff]
    %v1587 = vld [vmem:[%s1583 + $0x18] sm:$0xff]
    %s1588 = scalar_lea.vmem %s6, 96
    %v1589 = vld [vmem:[%s1588] sm:$0xff]
    %v1590 = vld [vmem:[%s1588 + $0x8] sm:$0xff]
    %v1591 = vld [vmem:[%s1588 + $0x10] sm:$0xff]
    %v1592 = vld [vmem:[%s1588 + $0x18] sm:$0xff]
    %1593 = vadd.xlane.f32.xlu0 %v1565
    %v1594 = vpop.xlane.xlu0 %1593
    %1595 = vadd.xlane.f32.xlu0 %v1570
    %v1596 = vpop.xlane.xlu0 %1595
    %1597 = vadd.xlane.f32.xlu0 %v1575
    %v1598 = vpop.xlane.xlu0 %1597
    %1599 = vadd.xlane.f32.xlu0 %v1580
    %v1600 = vpop.xlane.xlu0 %1599
    %v1601 = vmul.f32 %v1565, %v1565
    %v1602 = vmul.f32 %v1570, %v1570
    %v1603 = vmul.f32 %v1575, %v1575
    %v1604 = vmul.f32 %v1580, %v1580
    %1605 = vadd.xlane.f32.xlu0 %v1601
    %v1606 = vpop.xlane.xlu0 %1605
    %1607 = vadd.xlane.f32.xlu0 %v1602
    %v1608 = vpop.xlane.xlu0 %1607
    %1609 = vadd.xlane.f32.xlu0 %v1603
    %v1610 = vpop.xlane.xlu0 %1609
    %1611 = vadd.xlane.f32.xlu0 %v1604
    %v1612 = vpop.xlane.xlu0 %1611
    %v1613 = vmul.f32 %v1594, 0.0078125
    %v1614 = vmul.f32 %v1596, 0.0078125
    %v1615 = vmul.f32 %v1598, 0.0078125
    %v1616 = vmul.f32 %v1600, 0.0078125
    %v1617 = vmul.f32 %v1606, 0.0078125
    %v1618 = vmul.f32 %v1608, 0.0078125
    %v1619 = vmul.f32 %v1610, 0.0078125
    %v1620 = vmul.f32 %v1612, 0.0078125
    %v1621 = vmul.f32 %v1613, %v1613
    %v1622 = vmul.f32 %v1614, %v1614
    %v1623 = vmul.f32 %v1615, %v1615
    %v1624 = vmul.f32 %v1616, %v1616
    %v1625 = vsub.f32 %v1617, %v1621
    %v1626 = vsub.f32 %v1618, %v1622
    %v1627 = vsub.f32 %v1619, %v1623
    %v1628 = vsub.f32 %v1620, %v1624
    %v1629 = vsub.f32 %v1565, %v1613
    %v1630 = vsub.f32 %v1570, %v1614
    %v1631 = vsub.f32 %v1575, %v1615
    %v1632 = vsub.f32 %v1580, %v1616
    %v1633 = vadd.f32 %v1625, 1e-05
    %v1634 = vadd.f32 %v1626, 1e-05
    %v1635 = vadd.f32 %v1627, 1e-05
    %v1636 = vadd.f32 %v1628, 1e-05
    %v1637 = vrsqrt.pop %v1633
    %v1638 = vrsqrt.pop %v1634
    %v1639 = vrsqrt.pop %v1635
    %v1640 = vrsqrt.pop %v1636
    %v1641 = vmul.f32 %v1629, %v1637
    %v1642 = vmul.f32 %v1630, %v1638
    %v1643 = vmul.f32 %v1631, %v1639
    %v1644 = vmul.f32 %v1632, %v1640
    %1646 = vset.pattern.permute.xlu0 0
    %1647 = vperm.xlu0 %1646, %v1584
    %v1648 = vpop.permute.xlu0 %1647
    %1651 = vset.pattern.permute.xlu0 0
    %1652 = vperm.xlu0 %1651, %v1585
    %v1653 = vpop.permute.xlu0 %1652
    %1656 = vset.pattern.permute.xlu0 0
    %1657 = vperm.xlu0 %1656, %v1586
    %v1658 = vpop.permute.xlu0 %1657
    %1661 = vset.pattern.permute.xlu0 0
    %1662 = vperm.xlu0 %1661, %v1587
    %v1663 = vpop.permute.xlu0 %1662
    %v1665 = vmul.f32 %v1648, %v1641
    %v1666 = vmul.f32 %v1653, %v1642
    %v1667 = vmul.f32 %v1658, %v1643
    %v1668 = vmul.f32 %v1663, %v1644
    %1670 = vset.pattern.permute.xlu0 0
    %1671 = vperm.xlu0 %1670, %v1589
    %v1672 = vpop.permute.xlu0 %1671
    %1675 = vset.pattern.permute.xlu0 0
    %1676 = vperm.xlu0 %1675, %v1590
    %v1677 = vpop.permute.xlu0 %1676
    %1680 = vset.pattern.permute.xlu0 0
    %1681 = vperm.xlu0 %1680, %v1591
    %v1682 = vpop.permute.xlu0 %1681
    %1685 = vset.pattern.permute.xlu0 0
    %1686 = vperm.xlu0 %1685, %v1592
    %v1687 = vpop.permute.xlu0 %1686
    %v1689 = vadd.f32 %v1665, %v1672
    %v1690 = vadd.f32 %v1666, %v1677
    %v1691 = vadd.f32 %v1667, %v1682
    %v1692 = vadd.f32 %v1668, %v1687
    %v1693 = vadd.f32 %v1689, %v1051
    %v1694 = vadd.f32 %v1690, %v1052
    %v1695 = vadd.f32 %v1691, %v1053
    %v1696 = vadd.f32 %v1692, %v1054
    %v1697 = vmul.f32 %v1693, 0.70710677
    %v1698 = vmul.f32 %v1694, 0.70710677
    %v1699 = vmul.f32 %v1695, 0.70710677
    %v1700 = vmul.f32 %v1696, 0.70710677
    %v1701 = vand.u32 2147483647, %v1697
    %v1702 = vand.u32 2147483647, %v1698
    %v1703 = vand.u32 2147483647, %v1699
    %v1704 = vand.u32 2147483647, %v1700
    %v1705 = vmul.f32 %v1701, 0.3275911
    %v1706 = vmul.f32 %v1702, 0.3275911
    %v1707 = vmul.f32 %v1703, 0.3275911
    %v1708 = vmul.f32 %v1704, 0.3275911
    %v1709 = vadd.f32 %v1705, 1.0
    %v1710 = vadd.f32 %v1706, 1.0
    %v1711 = vadd.f32 %v1707, 1.0
    %v1712 = vadd.f32 %v1708, 1.0
    %v1713 = vrcp.pop %v1709
    %v1714 = vrcp.pop %v1710
    %v1715 = vrcp.pop %v1711
    %v1716 = vrcp.pop %v1712
    %v1717 = vmul.f32 %v1709, %v1713
    %v1718 = vmul.f32 %v1710, %v1714
    %v1719 = vmul.f32 %v1711, %v1715
    %v1720 = vmul.f32 %v1712, %v1716
    %v1721 = vsub.f32 2.0, %v1717
    %v1722 = vsub.f32 2.0, %v1718
    %v1723 = vsub.f32 2.0, %v1719
    %v1724 = vsub.f32 2.0, %v1720
    %v1725 = vmul.f32 %v1713, %v1721
    %v1726 = vmul.f32 %v1714, %v1722
    %v1727 = vmul.f32 %v1715, %v1723
    %v1728 = vmul.f32 %v1716, %v1724
    %v1729 = vmul.f32 %v1725, 1.0614054
    %v1730 = vmul.f32 %v1726, 1.0614054
    %v1731 = vmul.f32 %v1727, 1.0614054
    %v1732 = vmul.f32 %v1728, 1.0614054
    %v1733 = vadd.f32 %v1729, -1.4531521
    %v1734 = vadd.f32 %v1730, -1.4531521
    %v1735 = vadd.f32 %v1731, -1.4531521
    %v1736 = vadd.f32 %v1732, -1.4531521
    %v1737 = vmul.f32 %v1733, %v1725
    %v1738 = vmul.f32 %v1734, %v1726
    %v1739 = vmul.f32 %v1735, %v1727
    %v1740 = vmul.f32 %v1736, %v1728
    %v1741 = vadd.f32 %v1737, 1.4214138
    %v1742 = vadd.f32 %v1738, 1.4214138
    %v1743 = vadd.f32 %v1739, 1.4214138
    %v1744 = vadd.f32 %v1740, 1.4214138
    %v1745 = vmul.f32 %v1741, %v1725
    %v1746 = vmul.f32 %v1742, %v1726
    %v1747 = vmul.f32 %v1743, %v1727
    %v1748 = vmul.f32 %v1744, %v1728
    %v1749 = vadd.f32 %v1745, -0.28449672
    %v1750 = vadd.f32 %v1746, -0.28449672
    %v1751 = vadd.f32 %v1747, -0.28449672
    %v1752 = vadd.f32 %v1748, -0.28449672
    %v1753 = vmul.f32 %v1749, %v1725
    %v1754 = vmul.f32 %v1750, %v1726
    %v1755 = vmul.f32 %v1751, %v1727
    %v1756 = vmul.f32 %v1752, %v1728
    %v1757 = vadd.f32 %v1753, 0.2548296
    %v1758 = vadd.f32 %v1754, 0.2548296
    %v1759 = vadd.f32 %v1755, 0.2548296
    %v1760 = vadd.f32 %v1756, 0.2548296
    %v1761 = vmul.f32 %v1757, %v1725
    %v1762 = vmul.f32 %v1758, %v1726
    %v1763 = vmul.f32 %v1759, %v1727
    %v1764 = vmul.f32 %v1760, %v1728
    %v1765 = vsub.f32 0.0, %v1701
    %v1766 = vsub.f32 0.0, %v1702
    %v1767 = vsub.f32 0.0, %v1703
    %v1768 = vsub.f32 0.0, %v1704
    %v1769 = vmul.f32 %v1765, %v1701
    %v1770 = vmul.f32 %v1766, %v1702
    %v1771 = vmul.f32 %v1767, %v1703
    %v1772 = vmul.f32 %v1768, %v1704
    %v1773 = vmul.f32 %v1769, 1.442695
    %v1774 = vpow.pop %v1773
    %v1775 = vmul.f32 %v1770, 1.442695
    %v1776 = vpow.pop %v1775
    %v1777 = vmul.f32 %v1771, 1.442695
    %v1778 = vpow.pop %v1777
    %v1779 = vmul.f32 %v1772, 1.442695
    %v1780 = vpow.pop %v1779
    %v1781 = vmul.f32 %v1761, %v1774
    %v1782 = vmul.f32 %v1762, %v1776
    %v1783 = vmul.f32 %v1763, %v1778
    %v1784 = vmul.f32 %v1764, %v1780
    %v1785 = vsub.f32 1.0, %v1781
    %v1786 = vsub.f32 1.0, %v1782
    %v1787 = vsub.f32 1.0, %v1783
    %v1788 = vsub.f32 1.0, %v1784
    %vm1789 = vcmp.ge.f32.partialorder %v1697, 0.0
    %vm1790 = vcmp.ge.f32.partialorder %v1698, 0.0
    %vm1791 = vcmp.ge.f32.partialorder %v1699, 0.0
    %vm1792 = vcmp.ge.f32.partialorder %v1700, 0.0
    %v1793 = vsub.f32 0.0, %v1785
    %v1794 = vsub.f32 0.0, %v1786
    %v1795 = vsub.f32 0.0, %v1787
    %v1796 = vsub.f32 0.0, %v1788
    %v1797 = vsel %vm1789, %v1785, %v1793
    %v1798 = vsel %vm1790, %v1786, %v1794
    %v1799 = vsel %vm1791, %v1787, %v1795
    %v1800 = vsel %vm1792, %v1788, %v1796
    %v1801 = vmul.f32 %v1693, 0.5
    %v1802 = vmul.f32 %v1694, 0.5
    %v1803 = vmul.f32 %v1695, 0.5
    %v1804 = vmul.f32 %v1696, 0.5
    %v1805 = vadd.f32 %v1797, 1.0
    %v1806 = vadd.f32 %v1798, 1.0
    %v1807 = vadd.f32 %v1799, 1.0
    %v1808 = vadd.f32 %v1800, 1.0
    %v1809 = vmul.f32 %v1801, %v1805
    %v1810 = vmul.f32 %v1802, %v1806
    %v1811 = vmul.f32 %v1803, %v1807
    %v1812 = vmul.f32 %v1804, %v1808
    %v1813 = vld [vmem:[%s7] sm:$0xff]
    %v1814 = vld [vmem:[%s7 + $0x8] sm:$0xff]
    %v1815 = vld [vmem:[%s8] sm:$0xff]
    %v1816 = vld [vmem:[%s8 + $0x8] sm:$0xff]
    %1818 = vset.pattern.permute.xlu0 0
    %1819 = vperm.xlu0 %1818, %v1815
    %v1820 = vpop.permute.xlu0 %1819
    %1823 = vset.pattern.permute.xlu0 0
    %1824 = vperm.xlu0 %1823, %v1816
    %v1825 = vpop.permute.xlu0 %1824
    %vm1827 = vcmask 261120
    %v1829 = vsel %vm1827, %v1813, 0
    %v1832 = vsel %vm1827, %v1814, 0
    %1834 = vmatprep.subr.mxu0 0.0
    %1835 = vmatpush1.msra.mxu0 %v1809
    %1836 = vmatprep.subr.mxu0 0.0
    %1837 = vmatpush1.msra.mxu0 %v1810
    %1838 = vmatprep.subr.mxu0 0.0
    %1839 = vmatpush1.msra.mxu0 %v1811
    %1840 = vmatprep.subr.mxu0 0.0
    %1841 = vmatpush1.msra.mxu0 %v1812
    %1842 = vmatprep.subr.mxu0 0.0
    %1843 = vmatpush1.msra.mxu0 0.0
    %1844 = vmatprep.subr.mxu0 0.0
    %1845 = vmatpush1.msra.mxu0 0.0
    %1846 = vmatprep.subr.mxu0 0.0
    %1847 = vmatpush1.msra.mxu0 0.0
    %1848 = vmatprep.subr.mxu0 0.0
    %1849 = vmatpush1.msra.mxu0 0.0
    %1850 = vmatprep.subr.mxu0 0.0
    %1851 = vmatpush1.msra.mxu0 0.0
    %1852 = vmatprep.subr.mxu0 0.0
    %1853 = vmatpush1.msra.mxu0 0.0
    %1854 = vmatprep.subr.mxu0 0.0
    %1855 = vmatpush1.msra.mxu0 0.0
    %1856 = vmatprep.subr.mxu0 0.0
    %1857 = vmatpush1.msra.mxu0 0.0
    %1858 = vmatprep.subr.mxu0 0.0
    %1859 = vmatpush1.msra.mxu0 0.0
    %1860 = vmatprep.subr.mxu0 0.0
    %1861 = vmatpush1.msra.mxu0 0.0
    %1862 = vmatprep.subr.mxu0 0.0
    %1863 = vmatpush1.msra.mxu0 0.0
    %1864 = vmatprep.subr.mxu0 0.0
    %1865 = vmatpush1.msra.mxu0 0.0
    %1866 = vmatprep.subr.mxu0 0.0
    %1867 = vmatpush1.msra.mxu0 0.0
    %1868 = vmatprep.subr.mxu0 0.0
    %1869 = vmatpush1.msra.mxu0 0.0
    %1870 = vmatprep.subr.mxu0 0.0
    %1871 = vmatpush1.msra.mxu0 0.0
    %1872 = vmatprep.subr.mxu0 0.0
    %1873 = vmatpush1.msra.mxu0 0.0
    %1874 = vmatprep.subr.mxu0 0.0
    %1875 = vmatpush1.msra.mxu0 0.0
    %1876 = vmatprep.subr.mxu0 0.0
    %1877 = vmatpush1.msra.mxu0 0.0
    %1878 = vmatprep.subr.mxu0 0.0
    %1879 = vmatpush1.msra.mxu0 0.0
    %1880 = vmatprep.subr.mxu0 0.0
    %1881 = vmatpush1.msra.mxu0 0.0
    %1882 = vmatprep.subr.mxu0 0.0
    %1883 = vmatpush1.msra.mxu0 0.0
    %1884 = vmatprep.subr.mxu0 0.0
    %1885 = vmatpush1.msra.mxu0 0.0
    %1886 = vmatprep.subr.mxu0 0.0
    %1887 = vmatpush1.msra.mxu0 0.0
    %1888 = vmatprep.subr.mxu0 0.0
    %1889 = vmatpush1.msra.mxu0 0.0
    %1890 = vmatprep.subr.mxu0 0.0
    %1891 = vmatpush1.msra.mxu0 0.0
    %1892 = vmatprep.subr.mxu0 0.0
    %1893 = vmatpush1.msra.mxu0 0.0
    %1894 = vmatprep.subr.mxu0 0.0
    %1895 = vmatpush1.msra.mxu0 0.0
    %1896 = vmatprep.subr.mxu0 0.0
    %1897 = vmatpush1.msra.mxu0 0.0
    %1898 = vmatprep.mubr.f32.mxu0 0.0
    %1899 = vmatmul.mubr.f32.gmra.mrb[0].mxu0 %v1829
    %v1900 = vpop.f32.mrb[0].mxu0
    %v1901 = vadd.f32 %v1820, %v1900
    %v1902 = vpop.f32.mrb[0].mxu0
    %1903 = vmatprep.mubr.f32.mxu0 0.0
    %1904 = vmatmul.mubr.f32.gmra.mrb[0].mxu0 %v1832
    %v1905 = vpop.f32.mrb[0].mxu0
    %v1906 = vadd.f32 %v1825, %v1905
    %v1907 = vpop.f32.mrb[0].mxu0
    %1908 = vdwg.mxu0
    %1909 = vst [vmem:[#allocation2] sm:$0xff] %v1901
    %1910 = vst [vmem:[#allocation2 + $0x8] sm:$0xff] %v1906
    // Predicated region
    $region38: #{tpu_custom_call.1} parent=1 // pred_check
      _
    $region39: #{tpu_custom_call.1} parent=1 // pred_check_branch
      %1912 = sbr.rel (0) target = $region41
    $region40: #{tpu_custom_call.1} parent=1 // pred_region
      %s1914 = ssub.s32 256, 256
      %1915 = vsyncadd [#allocation3], %s1914
      %s1916 = sshll.u32 [#allocation2], 4
      %s1917 = int_to_ptr.vmem [resolvable:$true] %s1916
      %1922 = dma.vmem_to_hbm [thread:$0]  %s1917, 256, %s9, [#allocation3], 128, 128, 8
    $region41: #{tpu_custom_call.1} parent=1 // pred_fallthru
      _
    // Predicated region
    $region42: #{tpu_custom_call.1} parent=1 // pred_check
      _
    $region43: #{tpu_custom_call.1} parent=1 // pred_check_branch
      %1924 = sbr.rel (0) target = $region45
    $region44: #{tpu_custom_call.1} parent=1 // pred_region
      %1925 = dma.done [#allocation3], 256
    $region45: #{tpu_custom_call.1} parent=1 // pred_fallthru
      _
    %1926 = vsyncpa [#allocation3], 1

</llo_original>
